<compile_context>
chip_gen: v7x
topology: tpu7x:2x2x1
jax: 0.10.0
libtpu: 0.0.40
codegen_flags: <defaults>
</compile_context>

<pallas_src>
import functools

import jax
import jax.numpy as jnp
from jax import lax
from jax.experimental import pallas as pl
from jax.experimental.pallas import tpu as pltpu


def _round_up(x, m):
    return (x + m - 1) // m * m


# ----------------------------------------------------------------------------
# Fused Pallas kernel: one (batch element, output-row tile) per grid step
# ----------------------------------------------------------------------------

def _res_block_kernel(xp_ref, id_ref, w1_ref, b1_ref, w2_ref, b2_ref, w3_ref, b3_ref,
                      o_ref, *, stride, th, h_in, w_in):
    """Fused bottleneck block.

    xp_ref : (1, Hp, Wp, Cin)   bf16  zero-padded NHWC input (whole image, VMEM-resident)
    id_ref : (1, Cexp, th*Wo)   f32   residual tile, flattened-NCHW layout (lane dense)
    w1_ref : (Cin, Cmid)        bf16  conv1 weight with BN1 scale folded in
    b1_ref : (1, Cmid)          f32   folded BN1 bias
    w2_ref : (9*Cmid, Cmid)     bf16  conv2 (3x3, HWIO flattened) with BN2 scale folded in
    b2_ref : (1, Cmid)          f32
    w3_ref : (Cexp, Cmid)       bf16  conv3 weight (PRE-TRANSPOSED) with BN3 scale folded in
    b3_ref : (Cexp, 1)          f32
    o_ref  : (1, Cexp, th*Wo)   f32   output tile, flattened-NCHW layout (lane dense)

    NOTE: the pad mask hard-codes kernel=3 / pad=1 conv2 geometry (via h_in/w_in).
    """
    _, _hp, wp, cin = xp_ref.shape
    cmid = w1_ref.shape[1]
    wo = (w_in - 1) // stride + 1            # conv2 output width (pad=1, k=3)
    rh = (th - 1) * stride + 3               # padded input rows needed by this row tile

    r = pl.program_id(1)
    row0 = r * (th * stride)                 # first padded-input row of this tile

    # ---- conv1 (1x1) + BN1 + ReLU ------------------------------------------------
    # f32 matmul (bf16 x bf16 -> f32 dots are rejected by the interpret executor);
    # operands are bf16 in HBM and upcast once here.
    x2d = xp_ref[0, pl.ds(row0, rh), :, :].astype(jnp.float32).reshape(rh * wp, cin)
    t1 = jnp.dot(x2d, w1_ref[...].astype(jnp.float32),
                 preferred_element_type=jnp.float32)                    # (rh*wp, cmid)
    t1 = jnp.maximum(t1 + b1_ref[...], 0.0).reshape(rh, wp, cmid)

    # Pad-validity mask at (rh, wp, 1); broadcast over channels in the where().
    rows = lax.broadcasted_iota(jnp.int32, (rh, wp, 1), 0) + row0
    cols = lax.broadcasted_iota(jnp.int32, (rh, wp, 1), 1)
    valid = (rows >= 1) & (rows <= h_in) & (cols >= 1) & (cols <= w_in)
    h1 = jnp.where(valid, t1, 0.0)                                      # zero-padded h1

    # ---- conv2 (3x3, stride) + BN2 + ReLU as one im2col matmul (K = 9*Cmid) -------
    taps = []
    for kh in range(3):
        for kw in range(3):
            taps.append(h1[kh:kh + (th - 1) * stride + 1:stride,
                           kw:kw + (wo - 1) * stride + 1:stride, :])    # (th, wo, cmid)
    patches = jnp.concatenate(taps, axis=-1).reshape(th * wo, 9 * cmid)
    t2 = jnp.dot(patches, w2_ref[...].astype(jnp.float32),
                 preferred_element_type=jnp.float32)                    # (th*wo, cmid)
    h2 = jnp.maximum(t2 + b2_ref[...], 0.0)

    # ---- conv3 (1x1) + BN3 + residual add + ReLU, computed directly in (Cexp, pix) ---
    # A.B^T form (trans_b): no in-kernel transpose of the (th*Wo, Cexp) result needed.
    t3 = lax.dot_general(w3_ref[...].astype(jnp.float32), h2,
                         (((1,), (1,)), ((), ())),
                         preferred_element_type=jnp.float32)            # (cexp, th*wo)
    y = jnp.maximum(t3 + b3_ref[...] + id_ref[0], 0.0)
    o_ref[0] = y.astype(o_ref.dtype)


# ----------------------------------------------------------------------------
# Wrapper (PyTorch-style NCHW in / NCHW out)
# ----------------------------------------------------------------------------

def res_block_forward(x_nchw, params, stride=1, identity_downsample=None, row_tile=8):
    N, Cin, H, W = x_nchw.shape
    Cmid = params["w1"].shape[1]
    Cexp = params["w3"].shape[1]
    Ho = (H - 1) // stride + 1
    Wo = (W - 1) // stride + 1

    # Residual branch (PyTorch-style: NCHW -> NCHW). Consumed as flattened NCHW (free).
    if identity_downsample is not None:
        identity = identity_downsample(x_nchw)
    else:
        assert stride == 1 and Cin == Cexp, (
            "Res_block: identity_downsample is required when stride > 1 or "
            "in_channels != out_channels * expansion (same constraint as PyTorch).")
        identity = x_nchw
    assert identity.shape == (N, Cexp, Ho, Wo)
    id_flat = identity.reshape(N, Cexp, Ho * Wo).astype(jnp.float32)

    # Main branch input: NHWC, zero-padded for the 3x3 conv; width padded to a multiple
    # of 8 so the in-kernel f32 flatten is layout-trivial; bf16 halves HBM/DMA bytes.
    # TODO(synk): drop the NCHW->NHWC transpose if the surrounding model keeps NHWC.
    Wp = _round_up(W + 2, 8)
    Hp = H + 2
    x = jnp.transpose(x_nchw, (0, 2, 3, 1))
    xp = jnp.pad(x, ((0, 0), (1, 1), (1, Wp - W - 1), (0, 0))).astype(jnp.bfloat16)

    # Row-tile size: divides Ho and keeps the output store 128-lane dense
    # (th*Wo % 128 == 0) when possible; otherwise falls back to a full-extent block
    # (correct, but masked partial stores -> known perf cliff).
    th = Ho
    for cand in range(min(row_tile, Ho), 0, -1):
        if Ho % cand == 0 and (cand * Wo) % 128 == 0:
            th = cand
            break

    w1 = params["w1"].astype(jnp.bfloat16)                            # (Cin, Cmid)
    w2 = params["w2"].reshape(9 * Cmid, Cmid).astype(jnp.bfloat16)    # (3,3,Cmid,Cmid)->flat
    w3t = params["w3"].T.astype(jnp.bfloat16)                         # (Cexp, Cmid), pre-T
    b1 = params["b1"].reshape(1, Cmid).astype(jnp.float32)
    b2 = params["b2"].reshape(1, Cmid).astype(jnp.float32)
    b3 = params["b3"].reshape(Cexp, 1).astype(jnp.float32)

    kernel = functools.partial(_res_block_kernel, stride=stride, th=th, h_in=H, w_in=W)

    out = pl.pallas_call(
        kernel,
        out_shape=jax.ShapeDtypeStruct((N, Cexp, Ho * Wo), jnp.float32),
        grid_spec=pltpu.PrefetchScalarGridSpec(
            num_scalar_prefetch=0,
            grid=(N, Ho // th),
            in_specs=[
                # whole padded image: index_map constant in r -> stays VMEM resident
                pl.BlockSpec((1, Hp, Wp, Cin), lambda n, r: (n, 0, 0, 0)),
                pl.BlockSpec((1, Cexp, th * Wo), lambda n, r: (n, 0, r)),
                pl.BlockSpec((Cin, Cmid), lambda n, r: (0, 0)),
                pl.BlockSpec((1, Cmid), lambda n, r: (0, 0)),
                pl.BlockSpec((9 * Cmid, Cmid), lambda n, r: (0, 0)),
                pl.BlockSpec((1, Cmid), lambda n, r: (0, 0)),
                pl.BlockSpec((Cexp, Cmid), lambda n, r: (0, 0)),
                pl.BlockSpec((Cexp, 1), lambda n, r: (0, 0)),
            ],
            out_specs=pl.BlockSpec((1, Cexp, th * Wo), lambda n, r: (n, 0, r)),
        ),
        compiler_params=pltpu.CompilerParams(
            dimension_semantics=("parallel", "parallel"),
            vmem_limit_bytes=48 * 1024 * 1024,
        ),
    )(xp, id_flat, w1, b1, w2, b2, w3t, b3)

    # Output is already in NCHW layout: only a free reshape, no transpose pass.
    return out.reshape(N, Cexp, Ho, Wo)


# ----------------------------------------------------------------------------
# Parameters: eval-mode BatchNorm + conv bias folded into conv weight & bias
# ----------------------------------------------------------------------------

def fold_conv_bn(w, conv_bias, gamma, beta, mean, var, eps=1e-5):
    scale = gamma / jnp.sqrt(var + eps)           # (Cout,)
    w_folded = w * scale                          # scale over the output-channel (last) dim
    bias = (conv_bias - mean) * scale + beta
    return w_folded, bias


def make_params(key, in_channels, out_channels, expansion=4, dtype=jnp.float32):
    cmid = out_channels
    cexp = out_channels * expansion
    ks = jax.random.split(key, 9)

    def bn(k, c):
        k0, k1, k2, k3 = jax.random.split(k, 4)
        gamma = 1.0 + 0.1 * jax.random.normal(k0, (c,), dtype)
        beta = 0.1 * jax.random.normal(k1, (c,), dtype)
        mean = 0.1 * jax.random.normal(k2, (c,), dtype)
        var = jax.random.uniform(k3, (c,), dtype, minval=0.5, maxval=1.5)
        return gamma, beta, mean, var

    w1 = 0.1 * jax.random.normal(ks[0], (in_channels, cmid), dtype)          # 1x1, (Cin,Cmid)
    cb1 = 0.1 * jax.random.normal(ks[1], (cmid,), dtype)
    w2 = 0.1 * jax.random.normal(ks[2], (3, 3, cmid, cmid), dtype)           # 3x3, HWIO
    cb2 = 0.1 * jax.random.normal(ks[3], (cmid,), dtype)
    w3 = 0.1 * jax.random.normal(ks[4], (cmid, cexp), dtype)                 # 1x1, (Cmid,Cexp)
    cb3 = 0.1 * jax.random.normal(ks[5], (cexp,), dtype)

    w1f, b1 = fold_conv_bn(w1, cb1, *bn(ks[6], cmid))
    w2f, b2 = fold_conv_bn(w2, cb2, *bn(ks[7], cmid))
    w3f, b3 = fold_conv_bn(w3, cb3, *bn(ks[8], cexp))
    return dict(w1=w1f, b1=b1, w2=w2f, b2=b2, w3=w3f, b3=b3)


# ----------------------------------------------------------------------------
# Pure-JAX reference (same folded math; only HBM-stored operands are bf16-rounded,
# matching the kernel which computes everything in f32)
# ----------------------------------------------------------------------------

def reference_forward(x_nchw, params, stride=1):
    f32, bf16 = jnp.float32, jnp.bfloat16
    rnd = lambda a: a.astype(bf16).astype(f32)     # mimic bf16 HBM storage of x / weights
    hi = lax.Precision.HIGHEST

    x = rnd(jnp.transpose(x_nchw, (0, 2, 3, 1)))
    identity = jnp.transpose(x_nchw, (0, 2, 3, 1)).astype(f32)
    w1, w2, w3 = rnd(params["w1"]), rnd(params["w2"]), rnd(params["w3"])

    h = jnp.maximum(jnp.einsum("nhwc,cm->nhwm", x, w1, precision=hi) + params["b1"], 0.0)
    h = lax.conv_general_dilated(h, w2, window_strides=(stride, stride),
                                 padding=((1, 1), (1, 1)),
                                 dimension_numbers=("NHWC", "HWIO", "NHWC"),
                                 precision=hi)
    h = jnp.maximum(h + params["b2"], 0.0)
    y = jnp.einsum("nhwm,me->nhwe", h, w3, precision=hi) + params["b3"] + identity
    y = jnp.maximum(y, 0.0)
    return jnp.transpose(y, (0, 3, 1, 2))


# ----------------------------------------------------------------------------
# Main
# ----------------------------------------------------------------------------

if __name__ == "__main__":
    key = jax.random.PRNGKey(0)
    k_x, k_p = jax.random.split(key)

    # Small shapes: batch=2, in_channels=16, out_channels=4 (expansion 4 -> Cexp=16),
    # spatial 16x16, stride=1, identity_downsample=None -> residual add is shape-valid,
    # exactly as required by the PyTorch module.
    N, Cin, H, W = 2, 16, 16, 16
    out_channels = 4
    stride = 1

    x = jax.random.normal(k_x, (N, Cin, H, W), jnp.float32)   # PyTorch-style NCHW input
    params = make_params(k_p, Cin, out_channels)

    fwd = jax.jit(functools.partial(res_block_forward, stride=stride))
    y = jax.block_until_ready(fwd(x, params))

    y_ref = reference_forward(x, params, stride=stride)
    assert y.shape == (N, out_channels * 4, H, W)
    assert jnp.allclose(y, y_ref, rtol=1e-2, atol=1e-2), (
        "mismatch vs reference, max abs err = %f" % float(jnp.max(jnp.abs(y - y_ref))))

    print("KERNEL_OK")
</pallas_src>

<mosaic_0001>
module attributes {stable_mosaic.version = 11 : i64} {
  func.func @_res_block_kernel(%arg0: i32, %arg1: i32, %arg2: memref<1x18x24x16xbf16, #tpu.memory_space<vmem>>, %arg3: memref<1x16x128xf32, #tpu.memory_space<vmem>>, %arg4: memref<16x4xbf16, #tpu.memory_space<vmem>>, %arg5: memref<1x4xf32, #tpu.memory_space<vmem>>, %arg6: memref<36x4xbf16, #tpu.memory_space<vmem>>, %arg7: memref<1x4xf32, #tpu.memory_space<vmem>>, %arg8: memref<16x4xbf16, #tpu.memory_space<vmem>>, %arg9: memref<16x1xf32, #tpu.memory_space<vmem>>, %arg10: memref<1x16x128xf32, #tpu.memory_space<vmem>>) attributes {dimension_semantics = [#tpu.dimension_semantics<parallel>, #tpu.dimension_semantics<parallel>], iteration_bounds = array<i64: 2, 2>, scalar_prefetch = 0 : i64, scratch_operands = 0 : i64, tpu.core_type = #tpu.core_type<tc>, window_params = [{transform_indices = @transform_0, window_bounds = array<i64: 1, 18, 24, 16>}, {transform_indices = @transform_1, window_bounds = array<i64: 1, 16, 128>}, {pipeline_mode = #tpu.pipeline_mode<synchronous>, transform_indices = @transform_2, window_bounds = array<i64: 16, 4>}, {pipeline_mode = #tpu.pipeline_mode<synchronous>, transform_indices = @transform_3, window_bounds = array<i64: 1, 4>}, {pipeline_mode = #tpu.pipeline_mode<synchronous>, transform_indices = @transform_4, window_bounds = array<i64: 36, 4>}, {pipeline_mode = #tpu.pipeline_mode<synchronous>, transform_indices = @transform_5, window_bounds = array<i64: 1, 4>}, {pipeline_mode = #tpu.pipeline_mode<synchronous>, transform_indices = @transform_6, window_bounds = array<i64: 16, 4>}, {pipeline_mode = #tpu.pipeline_mode<synchronous>, transform_indices = @transform_7, window_bounds = array<i64: 16, 1>}, {transform_indices = @transform_8, window_bounds = array<i64: 1, 16, 128>}]} {
    %c8_i32 = arith.constant 8 : i32
    %0 = arith.muli %arg1, %c8_i32 : i32
    %c0 = arith.constant 0 : index
    %1 = arith.index_cast %0 : i32 to index
    %c0_0 = arith.constant 0 : index
    %c0_1 = arith.constant 0 : index
    %2 = vector.load %arg2[%c0, %1, %c0_0, %c0_1] : memref<1x18x24x16xbf16, #tpu.memory_space<vmem>>, vector<1x10x24x16xbf16>
    %3 = vector.shape_cast %2 : vector<1x10x24x16xbf16> to vector<10x24x16xbf16>
    %4 = arith.extf %3 : vector<10x24x16xbf16> to vector<10x24x16xf32>
    %5 = vector.shape_cast %4 : vector<10x24x16xf32> to vector<240x16xf32>
    %c0_2 = arith.constant 0 : index
    %c0_3 = arith.constant 0 : index
    %6 = vector.load %arg4[%c0_2, %c0_3] : memref<16x4xbf16, #tpu.memory_space<vmem>>, vector<16x4xbf16>
    %7 = arith.extf %6 : vector<16x4xbf16> to vector<16x4xf32>
    %cst = arith.constant dense<0.000000e+00> : vector<240x4xf32>
    %8 = tpu.matmul %5, %7, %cst {dimension_numbers = #tpu.dot_dimension_numbers<[1], [0], [0], [1], [0, 0, 1, 1], [], []>} : vector<240x16xf32>, vector<16x4xf32>, vector<240x4xf32> -> vector<240x4xf32>
    %c0_4 = arith.constant 0 : index
    %c0_5 = arith.constant 0 : index
    %9 = vector.load %arg5[%c0_4, %c0_5] : memref<1x4xf32, #tpu.memory_space<vmem>>, vector<1x4xf32>
    %10 = vector.broadcast %9 : vector<1x4xf32> to vector<240x4xf32>
    %11 = arith.addf %8, %10 : vector<240x4xf32>
    %cst_6 = arith.constant 0.000000e+00 : f32
    %12 = vector.broadcast %cst_6 : f32 to vector<240x4xf32>
    %13 = arith.maximumf %11, %12 : vector<240x4xf32>
    %14 = vector.shape_cast %13 : vector<240x4xf32> to vector<10x24x4xf32>
    %15 = tpu.iota {dimensions = array<i32: 0>} : vector<10x24x1xi32>
    %16 = vector.broadcast %0 : i32 to vector<10x24x1xi32>
    %17 = arith.addi %15, %16 : vector<10x24x1xi32>
    %18 = tpu.iota {dimensions = array<i32: 1>} : vector<10x24x1xi32>
    %c1_i32 = arith.constant 1 : i32
    %19 = vector.broadcast %c1_i32 : i32 to vector<10x24x1xi32>
    %20 = arith.cmpi sge, %17, %19 : vector<10x24x1xi32>
    %c16_i32 = arith.constant 16 : i32
    %21 = vector.broadcast %c16_i32 : i32 to vector<10x24x1xi32>
    %22 = arith.cmpi sle, %17, %21 : vector<10x24x1xi32>
    %23 = arith.andi %20, %22 : vector<10x24x1xi1>
    %c1_i32_7 = arith.constant 1 : i32
    %24 = vector.broadcast %c1_i32_7 : i32 to vector<10x24x1xi32>
    %25 = arith.cmpi sge, %18, %24 : vector<10x24x1xi32>
    %26 = arith.andi %23, %25 : vector<10x24x1xi1>
    %c16_i32_8 = arith.constant 16 : i32
    %27 = vector.broadcast %c16_i32_8 : i32 to vector<10x24x1xi32>
    %28 = arith.cmpi sle, %18, %27 : vector<10x24x1xi32>
    %29 = arith.andi %26, %28 : vector<10x24x1xi1>
    %cst_9 = arith.constant 0.000000e+00 : f32
    %30 = vector.shape_cast %29 : vector<10x24x1xi1> to vector<10x24x1xi1>
    %31 = vector.broadcast %30 : vector<10x24x1xi1> to vector<10x24x4xi1>
    %32 = vector.broadcast %cst_9 : f32 to vector<10x24x4xf32>
    %33 = arith.select %31, %14, %32 : vector<10x24x4xi1>, vector<10x24x4xf32>
    %34 = vector.extract_strided_slice %33 {offsets = [0, 0, 0], sizes = [8, 16, 4], strides = [1, 1, 1]} : vector<10x24x4xf32> to vector<8x16x4xf32>
    %35 = vector.extract_strided_slice %33 {offsets = [0, 1, 0], sizes = [8, 16, 4], strides = [1, 1, 1]} : vector<10x24x4xf32> to vector<8x16x4xf32>
    %36 = vector.extract_strided_slice %33 {offsets = [0, 2, 0], sizes = [8, 16, 4], strides = [1, 1, 1]} : vector<10x24x4xf32> to vector<8x16x4xf32>
    %37 = vector.extract_strided_slice %33 {offsets = [1, 0, 0], sizes = [8, 16, 4], strides = [1, 1, 1]} : vector<10x24x4xf32> to vector<8x16x4xf32>
    %38 = vector.extract_strided_slice %33 {offsets = [1, 1, 0], sizes = [8, 16, 4], strides = [1, 1, 1]} : vector<10x24x4xf32> to vector<8x16x4xf32>
    %39 = vector.extract_strided_slice %33 {offsets = [1, 2, 0], sizes = [8, 16, 4], strides = [1, 1, 1]} : vector<10x24x4xf32> to vector<8x16x4xf32>
    %40 = vector.extract_strided_slice %33 {offsets = [2, 0, 0], sizes = [8, 16, 4], strides = [1, 1, 1]} : vector<10x24x4xf32> to vector<8x16x4xf32>
    %41 = vector.extract_strided_slice %33 {offsets = [2, 1, 0], sizes = [8, 16, 4], strides = [1, 1, 1]} : vector<10x24x4xf32> to vector<8x16x4xf32>
    %42 = vector.extract_strided_slice %33 {offsets = [2, 2, 0], sizes = [8, 16, 4], strides = [1, 1, 1]} : vector<10x24x4xf32> to vector<8x16x4xf32>
    %43 = tpu.concatenate %34, %35, %36, %37, %38, %39, %40, %41, %42 in 2 : vector<8x16x4xf32>, vector<8x16x4xf32>, vector<8x16x4xf32>, vector<8x16x4xf32>, vector<8x16x4xf32>, vector<8x16x4xf32>, vector<8x16x4xf32>, vector<8x16x4xf32>, vector<8x16x4xf32> -> vector<8x16x36xf32>
    %44 = vector.shape_cast %43 : vector<8x16x36xf32> to vector<128x36xf32>
    %c0_10 = arith.constant 0 : index
    %c0_11 = arith.constant 0 : index
    %45 = vector.load %arg6[%c0_10, %c0_11] : memref<36x4xbf16, #tpu.memory_space<vmem>>, vector<36x4xbf16>
    %46 = arith.extf %45 : vector<36x4xbf16> to vector<36x4xf32>
    %cst_12 = arith.constant dense<0.000000e+00> : vector<128x4xf32>
    %47 = tpu.matmul %44, %46, %cst_12 {dimension_numbers = #tpu.dot_dimension_numbers<[1], [0], [0], [1], [0, 0, 1, 1], [], []>} : vector<128x36xf32>, vector<36x4xf32>, vector<128x4xf32> -> vector<128x4xf32>
    %c0_13 = arith.constant 0 : index
    %c0_14 = arith.constant 0 : index
    %48 = vector.load %arg7[%c0_13, %c0_14] : memref<1x4xf32, #tpu.memory_space<vmem>>, vector<1x4xf32>
    %49 = vector.broadcast %48 : vector<1x4xf32> to vector<128x4xf32>
    %50 = arith.addf %47, %49 : vector<128x4xf32>
    %cst_15 = arith.constant 0.000000e+00 : f32
    %51 = vector.broadcast %cst_15 : f32 to vector<128x4xf32>
    %52 = arith.maximumf %50, %51 : vector<128x4xf32>
    %c0_16 = arith.constant 0 : index
    %c0_17 = arith.constant 0 : index
    %53 = vector.load %arg8[%c0_16, %c0_17] : memref<16x4xbf16, #tpu.memory_space<vmem>>, vector<16x4xbf16>
    %54 = arith.extf %53 : vector<16x4xbf16> to vector<16x4xf32>
    %cst_18 = arith.constant dense<0.000000e+00> : vector<16x128xf32>
    %55 = tpu.matmul %54, %52, %cst_18 {dimension_numbers = #tpu.dot_dimension_numbers<[1], [1], [0], [0], [0, 0, 1, 0], [], []>} : vector<16x4xf32>, vector<128x4xf32>, vector<16x128xf32> -> vector<16x128xf32>
    %c0_19 = arith.constant 0 : index
    %c0_20 = arith.constant 0 : index
    %56 = vector.load %arg9[%c0_19, %c0_20] : memref<16x1xf32, #tpu.memory_space<vmem>>, vector<16x1xf32>
    %57 = vector.broadcast %56 : vector<16x1xf32> to vector<16x128xf32>
    %58 = arith.addf %55, %57 : vector<16x128xf32>
    %c0_21 = arith.constant 0 : index
    %c0_22 = arith.constant 0 : index
    %c0_23 = arith.constant 0 : index
    %59 = vector.load %arg3[%c0_21, %c0_22, %c0_23] : memref<1x16x128xf32, #tpu.memory_space<vmem>>, vector<1x16x128xf32>
    %60 = vector.shape_cast %59 : vector<1x16x128xf32> to vector<16x128xf32>
    %61 = arith.addf %58, %60 : vector<16x128xf32>
    %cst_24 = arith.constant 0.000000e+00 : f32
    %62 = vector.broadcast %cst_24 : f32 to vector<16x128xf32>
    %63 = arith.maximumf %61, %62 : vector<16x128xf32>
    %c0_25 = arith.constant 0 : index
    %c0_26 = arith.constant 0 : index
    %c0_27 = arith.constant 0 : index
    %64 = vector.load %arg10[%c0_25, %c0_26, %c0_27] : memref<1x16x128xf32, #tpu.memory_space<vmem>>, vector<1x16x128xf32>
    %65 = vector.shape_cast %64 : vector<1x16x128xf32> to vector<16x128xf32>
    %66 = vector.shape_cast %63 : vector<16x128xf32> to vector<1x16x128xf32>
    tpu.vector_store %arg10[%c0_25, %c0_26, %c0_27], %66 {strides = array<i32>} : memref<1x16x128xf32, #tpu.memory_space<vmem>>, vector<1x16x128xf32>,
    return
  }
  func.func @transform_0(%arg0: i32, %arg1: i32) -> (i32, i32, i32, i32) {
    %c0_i32 = arith.constant 0 : i32
    %c0_i32_0 = arith.constant 0 : i32
    %c0_i32_1 = arith.constant 0 : i32
    %c0_i32_2 = arith.constant 0 : i32
    return %arg0, %c0_i32, %c0_i32_0, %c0_i32_1 : i32, i32, i32, i32
  }
  func.func @transform_1(%arg0: i32, %arg1: i32) -> (i32, i32, i32) {
    %c0_i32 = arith.constant 0 : i32
    %c0_i32_0 = arith.constant 0 : i32
    return %arg0, %c0_i32, %arg1 : i32, i32, i32
  }
  func.func @transform_2(%arg0: i32, %arg1: i32) -> (i32, i32) {
    %c0_i32 = arith.constant 0 : i32
    %c0_i32_0 = arith.constant 0 : i32
    %c0_i32_1 = arith.constant 0 : i32
    return %c0_i32, %c0_i32_0 : i32, i32
  }
  func.func @transform_3(%arg0: i32, %arg1: i32) -> (i32, i32) {
    %c0_i32 = arith.constant 0 : i32
    %c0_i32_0 = arith.constant 0 : i32
    %c0_i32_1 = arith.constant 0 : i32
    return %c0_i32, %c0_i32_0 : i32, i32
  }
  func.func @transform_4(%arg0: i32, %arg1: i32) -> (i32, i32) {
    %c0_i32 = arith.constant 0 : i32
    %c0_i32_0 = arith.constant 0 : i32
    %c0_i32_1 = arith.constant 0 : i32
    return %c0_i32, %c0_i32_0 : i32, i32
  }
  func.func @transform_5(%arg0: i32, %arg1: i32) -> (i32, i32) {
    %c0_i32 = arith.constant 0 : i32
    %c0_i32_0 = arith.constant 0 : i32
    %c0_i32_1 = arith.constant 0 : i32
    return %c0_i32, %c0_i32_0 : i32, i32
  }
  func.func @transform_6(%arg0: i32, %arg1: i32) -> (i32, i32) {
    %c0_i32 = arith.constant 0 : i32
    %c0_i32_0 = arith.constant 0 : i32
    %c0_i32_1 = arith.constant 0 : i32
    return %c0_i32, %c0_i32_0 : i32, i32
  }
  func.func @transform_7(%arg0: i32, %arg1: i32) -> (i32, i32) {
    %c0_i32 = arith.constant 0 : i32
    %c0_i32_0 = arith.constant 0 : i32
    %c0_i32_1 = arith.constant 0 : i32
    return %c0_i32, %c0_i32_0 : i32, i32
  }
  func.func @transform_8(%arg0: i32, %arg1: i32) -> (i32, i32, i32) {
    %c0_i32 = arith.constant 0 : i32
    %c0_i32_0 = arith.constant 0 : i32
    return %arg0, %c0_i32, %arg1 : i32, i32, i32
  }
}

</mosaic_0001>

<llo_original>
// kernel: res_block_forward.1
$region0: #{res_block_forward.1}
  #allocation0 [shape = 'u32[]', space=smem, size = 0x4, offset = 0x4, fixed_abs, tag = 'smem constant byte address 0x4 - core index']
  #allocation1 [shape = 'u32[144,128]{1,0:T(1,128)}', space=vmem, size = 0x12000, scoped, tag = 'internal scratch']
  %s0 = inlined_call_operand.vmem [shape: bf16[2,18,24,16], index: 0, kind: input, shape index: {}]
  %s1 = inlined_call_operand.vmem [shape: f32[2,16,256], index: 1, kind: input, shape index: {}]
  %s2 = inlined_call_operand.vmem [shape: bf16[16,4], index: 2, kind: input, shape index: {}]
  %s3 = inlined_call_operand.vmem [shape: f32[1,4], index: 3, kind: input, shape index: {}]
  %s4 = inlined_call_operand.vmem [shape: bf16[36,4], index: 4, kind: input, shape index: {}]
  %s5 = inlined_call_operand.vmem [shape: f32[1,4], index: 5, kind: input, shape index: {}]
  %s6 = inlined_call_operand.vmem [shape: bf16[16,4], index: 6, kind: input, shape index: {}]
  %s7 = inlined_call_operand.vmem [shape: f32[16,1], index: 7, kind: input, shape index: {}]
  %s8 = inlined_call_operand.vmem [shape: f32[2,16,256], index: 8, kind: output, shape index: {}]
  %s9 = sld [smem:[#allocation0]]
  $region137: #{res_block_forward.1} parent=0
    _
  %s11 = ssub.s32 1, %s9
  %s12 = scalar_select 0, %s11, %s9
  $region1: #{res_block_forward.1} parent=0
    #allocation2 [shape = 'u8[16384]{0}', space=vmem, size = 0x4000, scoped, tag = 'input window, operand 1']
    #allocation3 [shape = 'u8[16384]{0}', space=vmem, size = 0x4000, scoped, tag = 'output window, operand 0']
    loop: start=0, step=1, limit=6
    $region2: #{res_block_forward.1} parent=1 // loop_pre_header
      _
    $region3: #{res_block_forward.1} parent=1 // loop_header
      %s14 = sphi 0, %s18
      %p15 = scmp.ge.s32.totalorder %s14, 6
      %s21 = sphi 0, %s33
      %s22 = sphi 0, %s29
      %s23 = sphi 0, %s21
      %s24 = sphi 0, %s22
      %s25 = sphi 0, %s23
      %s26 = sphi 0, %s24
      %s36 = sphi 0, %s38
      %s39 = sphi 0, %s36
      %s40 = sphi 0, %s39
      %s56 = sphi 0, %s40
      %s64 = sphi 0, %s66
      %s67 = sphi 0, %s64
      %s68 = sphi 0, %s67
      %s84 = sphi 0, %s68
      %s88 = sphi 0, %s88
      %s90 = sphi 0, %s88
      %s91 = sphi 0, %s90
      %s105 = sphi 0, %s91
      %s109 = sphi 0, %s109
      %s111 = sphi 0, %s109
      %s112 = sphi 0, %s111
      %s126 = sphi 0, %s112
      %s130 = sphi 0, %s130
      %s132 = sphi 0, %s130
      %s133 = sphi 0, %s132
      %s147 = sphi 0, %s133
      %s151 = sphi 0, %s151
      %s153 = sphi 0, %s151
      %s154 = sphi 0, %s153
      %s168 = sphi 0, %s154
      %s172 = sphi 0, %s172
      %s174 = sphi 0, %s172
      %s175 = sphi 0, %s174
      %s189 = sphi 0, %s175
      %s193 = sphi 0, %s193
      %s195 = sphi 0, %s193
      %s196 = sphi 0, %s195
      %s210 = sphi 0, %s196
      %s218 = sphi 0, %s220
      %s221 = sphi 0, %s218
      %s222 = sphi 0, %s221
      %s238 = sphi 0, %s222
    $region4: #{res_block_forward.1} parent=1 // loop_header_branch
      %17 = sbr.rel (%p15) target = $region8
    $region5: #{res_block_forward.1} parent=1 // loop_body
      %s19 = ssub.s32 %s14, 1
      %s20 = ssub.s32 %s14, 2
      %s27 = sadd.s32 1, %s22
      %p28 = scmp.ge.s32.totalorder %s27, 2
      %s29 = scalar_select %p28, 0, %s27
      %s30 = sadd.s32 1, %s21
      %s31 = scalar_select %p28, %s30, %s21
      %p32 = scmp.ge.s32.totalorder %s31, 2
      %s33 = scalar_select %p32, 0, %s31
      %s34 = ssub.s32 %s21, %s33
      %p35 = scmp.eq.s32.totalorder %s34, 0
      %s37 = sadd.s32 %s36, 1
      %s38 = scalar_select %p35, %s36, %s37
      %p41 = pneg %p35
      %p42 = scmp.eq.s32.totalorder %s14, 3
      %p43 = por %p41, %p42
      %p44 = scmp.ne.s32.totalorder %s36, %s39
      %p45 = scmp.eq.s32.totalorder %s14, 0
      %p46 = por %p44, %p45
      %p47 = scmp.ne.s32.totalorder %s36, %s39
      %p48 = scmp.eq.s32.totalorder %s19, 3
      %p49 = por %p47, %p48
      %p50 = scmp.ne.s32.totalorder %s39, %s40
      %p51 = scmp.eq.s32.totalorder %s19, 0
      %p52 = por %p50, %p51
      %p53 = scmp.ne.s32.totalorder %s39, %s40
      %p54 = scmp.eq.s32.totalorder %s20, 3
      %p55 = por %p53, %p54
      %p57 = scmp.ne.s32.totalorder %s40, %s56
      %p58 = scmp.eq.s32.totalorder %s20, 0
      %p59 = por %p57, %p58
      %s60 = ssub.s32 %s21, %s33
      %s61 = ssub.s32 %s22, %s29
      %s62 = sor.u32 %s60, %s61
      %p63 = scmp.eq.s32.totalorder %s62, 0
      %s65 = sadd.s32 %s64, 1
      %s66 = scalar_select %p63, %s64, %s65
      %p69 = pneg %p63
      %p70 = scmp.eq.s32.totalorder %s14, 3
      %p71 = por %p69, %p70
      %p72 = scmp.ne.s32.totalorder %s64, %s67
      %p73 = scmp.eq.s32.totalorder %s14, 0
      %p74 = por %p72, %p73
      %p75 = scmp.ne.s32.totalorder %s64, %s67
      %p76 = scmp.eq.s32.totalorder %s19, 3
      %p77 = por %p75, %p76
      %p78 = scmp.ne.s32.totalorder %s67, %s68
      %p79 = scmp.eq.s32.totalorder %s19, 0
      %p80 = por %p78, %p79
      %p81 = scmp.ne.s32.totalorder %s67, %s68
      %p82 = scmp.eq.s32.totalorder %s20, 3
      %p83 = por %p81, %p82
      %p85 = scmp.ne.s32.totalorder %s68, %s84
      %p86 = scmp.eq.s32.totalorder %s20, 0
      %p87 = por %p85, %p86
      %s89 = sadd.s32 %s88, 1
      %p92 = scmp.eq.s32.totalorder %s14, 3
      %p93 = scmp.ne.s32.totalorder %s88, %s90
      %p94 = scmp.eq.s32.totalorder %s14, 0
      %p95 = por %p93, %p94
      %p96 = scmp.ne.s32.totalorder %s88, %s90
      %p97 = scmp.eq.s32.totalorder %s19, 3
      %p98 = por %p96, %p97
      %p99 = scmp.ne.s32.totalorder %s90, %s91
      %p100 = scmp.eq.s32.totalorder %s19, 0
      %p101 = por %p99, %p100
      %p102 = scmp.ne.s32.totalorder %s90, %s91
      %p103 = scmp.eq.s32.totalorder %s20, 3
      %p104 = por %p102, %p103
      %p106 = scmp.ne.s32.totalorder %s91, %s105
      %p107 = scmp.eq.s32.totalorder %s20, 0
      %p108 = por %p106, %p107
      %s110 = sadd.s32 %s109, 1
      %p113 = scmp.eq.s32.totalorder %s14, 3
      %p114 = scmp.ne.s32.totalorder %s109, %s111
      %p115 = scmp.eq.s32.totalorder %s14, 0
      %p116 = por %p114, %p115
      %p117 = scmp.ne.s32.totalorder %s109, %s111
      %p118 = scmp.eq.s32.totalorder %s19, 3
      %p119 = por %p117, %p118
      %p120 = scmp.ne.s32.totalorder %s111, %s112
      %p121 = scmp.eq.s32.totalorder %s19, 0
      %p122 = por %p120, %p121
      %p123 = scmp.ne.s32.totalorder %s111, %s112
      %p124 = scmp.eq.s32.totalorder %s20, 3
      %p125 = por %p123, %p124
      %p127 = scmp.ne.s32.totalorder %s112, %s126
      %p128 = scmp.eq.s32.totalorder %s20, 0
      %p129 = por %p127, %p128
      %s131 = sadd.s32 %s130, 1
      %p134 = scmp.eq.s32.totalorder %s14, 3
      %p135 = scmp.ne.s32.totalorder %s130, %s132
      %p136 = scmp.eq.s32.totalorder %s14, 0
      %p137 = por %p135, %p136
      %p138 = scmp.ne.s32.totalorder %s130, %s132
      %p139 = scmp.eq.s32.totalorder %s19, 3
      %p140 = por %p138, %p139
      %p141 = scmp.ne.s32.totalorder %s132, %s133
      %p142 = scmp.eq.s32.totalorder %s19, 0
      %p143 = por %p141, %p142
      %p144 = scmp.ne.s32.totalorder %s132, %s133
      %p145 = scmp.eq.s32.totalorder %s20, 3
      %p146 = por %p144, %p145
      %p148 = scmp.ne.s32.totalorder %s133, %s147
      %p149 = scmp.eq.s32.totalorder %s20, 0
      %p150 = por %p148, %p149
      %s152 = sadd.s32 %s151, 1
      %p155 = scmp.eq.s32.totalorder %s14, 3
      %p156 = scmp.ne.s32.totalorder %s151, %s153
      %p157 = scmp.eq.s32.totalorder %s14, 0
      %p158 = por %p156, %p157
      %p159 = scmp.ne.s32.totalorder %s151, %s153
      %p160 = scmp.eq.s32.totalorder %s19, 3
      %p161 = por %p159, %p160
      %p162 = scmp.ne.s32.totalorder %s153, %s154
      %p163 = scmp.eq.s32.totalorder %s19, 0
      %p164 = por %p162, %p163
      %p165 = scmp.ne.s32.totalorder %s153, %s154
      %p166 = scmp.eq.s32.totalorder %s20, 3
      %p167 = por %p165, %p166
      %p169 = scmp.ne.s32.totalorder %s154, %s168
      %p170 = scmp.eq.s32.totalorder %s20, 0
      %p171 = por %p169, %p170
      %s173 = sadd.s32 %s172, 1
      %p176 = scmp.eq.s32.totalorder %s14, 3
      %p177 = scmp.ne.s32.totalorder %s172, %s174
      %p178 = scmp.eq.s32.totalorder %s14, 0
      %p179 = por %p177, %p178
      %p180 = scmp.ne.s32.totalorder %s172, %s174
      %p181 = scmp.eq.s32.totalorder %s19, 3
      %p182 = por %p180, %p181
      %p183 = scmp.ne.s32.totalorder %s174, %s175
      %p184 = scmp.eq.s32.totalorder %s19, 0
      %p185 = por %p183, %p184
      %p186 = scmp.ne.s32.totalorder %s174, %s175
      %p187 = scmp.eq.s32.totalorder %s20, 3
      %p188 = por %p186, %p187
      %p190 = scmp.ne.s32.totalorder %s175, %s189
      %p191 = scmp.eq.s32.totalorder %s20, 0
      %p192 = por %p190, %p191
      %s194 = sadd.s32 %s193, 1
      %p197 = scmp.eq.s32.totalorder %s14, 3
      %p198 = scmp.ne.s32.totalorder %s193, %s195
      %p199 = scmp.eq.s32.totalorder %s14, 0
      %p200 = por %p198, %p199
      %p201 = scmp.ne.s32.totalorder %s193, %s195
      %p202 = scmp.eq.s32.totalorder %s19, 3
      %p203 = por %p201, %p202
      %p204 = scmp.ne.s32.totalorder %s195, %s196
      %p205 = scmp.eq.s32.totalorder %s19, 0
      %p206 = por %p204, %p205
      %p207 = scmp.ne.s32.totalorder %s195, %s196
      %p208 = scmp.eq.s32.totalorder %s20, 3
      %p209 = por %p207, %p208
      %p211 = scmp.ne.s32.totalorder %s196, %s210
      %p212 = scmp.eq.s32.totalorder %s20, 0
      %p213 = por %p211, %p212
      %s214 = ssub.s32 %s21, %s33
      %s215 = ssub.s32 %s22, %s29
      %s216 = sor.u32 %s214, %s215
      %p217 = scmp.eq.s32.totalorder %s216, 0
      %s219 = sadd.s32 %s218, 1
      %s220 = scalar_select %p217, %s218, %s219
      %p223 = pneg %p217
      %p224 = scmp.eq.s32.totalorder %s14, 3
      %p225 = por %p223, %p224
      %p226 = scmp.ne.s32.totalorder %s218, %s221
      %p227 = scmp.eq.s32.totalorder %s14, 0
      %p228 = por %p226, %p227
      %p229 = scmp.ne.s32.totalorder %s218, %s221
      %p230 = scmp.eq.s32.totalorder %s19, 3
      %p231 = por %p229, %p230
      %p232 = scmp.ne.s32.totalorder %s221, %s222
      %p233 = scmp.eq.s32.totalorder %s19, 0
      %p234 = por %p232, %p233
      %p235 = scmp.ne.s32.totalorder %s221, %s222
      %p236 = scmp.eq.s32.totalorder %s20, 3
      %p237 = por %p235, %p236
      %p239 = scmp.ne.s32.totalorder %s222, %s238
      %p240 = scmp.eq.s32.totalorder %s20, 0
      %p241 = por %p239, %p240
      %p242 = scmp.le.s32.totalorder 1, %s14
      %p243 = scmp.lt.s32.totalorder %s14, 5
      %p244 = pnand %p242, %p243
      %p245 = pneg %p244
      // Predicated region
      $region9: #{res_block_forward.1} parent=5 // pred_check
        _
      $region10: #{res_block_forward.1} parent=5 // pred_check_branch
        %247 = sbr.rel (%p244) target = $region12
      $region11: #{res_block_forward.1} parent=5 // pred_region
        %s248 = ssub.s32 %s14, 1
        // Predicated region
        $region13: #{res_block_forward.1} parent=11 // pred_check
          %p249 = pneg %p101
        $region14: #{res_block_forward.1} parent=11 // pred_check_branch
          %251 = sbr.rel (%p249) target = $region16
        $region15: #{res_block_forward.1} parent=11 // pred_region
          _
        $region16: #{res_block_forward.1} parent=11 // pred_fallthru
          _
        // Predicated region
        $region17: #{res_block_forward.1} parent=11 // pred_check
          %p252 = pneg %p122
        $region18: #{res_block_forward.1} parent=11 // pred_check_branch
          %254 = sbr.rel (%p252) target = $region20
        $region19: #{res_block_forward.1} parent=11 // pred_region
          _
        $region20: #{res_block_forward.1} parent=11 // pred_fallthru
          _
        // Predicated region
        $region21: #{res_block_forward.1} parent=11 // pred_check
          %p255 = pneg %p143
        $region22: #{res_block_forward.1} parent=11 // pred_check_branch
          %257 = sbr.rel (%p255) target = $region24
        $region23: #{res_block_forward.1} parent=11 // pred_region
          _
        $region24: #{res_block_forward.1} parent=11 // pred_fallthru
          _
        // Predicated region
        $region25: #{res_block_forward.1} parent=11 // pred_check
          %p258 = pneg %p164
        $region26: #{res_block_forward.1} parent=11 // pred_check_branch
          %260 = sbr.rel (%p258) target = $region28
        $region27: #{res_block_forward.1} parent=11 // pred_region
          _
        $region28: #{res_block_forward.1} parent=11 // pred_fallthru
          _
        // Predicated region
        $region29: #{res_block_forward.1} parent=11 // pred_check
          %p261 = pneg %p185
        $region30: #{res_block_forward.1} parent=11 // pred_check_branch
          %263 = sbr.rel (%p261) target = $region32
        $region31: #{res_block_forward.1} parent=11 // pred_region
          _
        $region32: #{res_block_forward.1} parent=11 // pred_fallthru
          _
        // Predicated region
        $region33: #{res_block_forward.1} parent=11 // pred_check
          %p264 = pneg %p206
        $region34: #{res_block_forward.1} parent=11 // pred_check_branch
          %266 = sbr.rel (%p264) target = $region36
        $region35: #{res_block_forward.1} parent=11 // pred_region
          _
        $region36: #{res_block_forward.1} parent=11 // pred_fallthru
          _
      $region12: #{res_block_forward.1} parent=5 // pred_fallthru
        _
      %p267 = scmp.lt.s32.totalorder %s14, 4
      // Predicated region
      $region37: #{res_block_forward.1} parent=5 // pred_check
        %p268 = pneg %p267
      $region38: #{res_block_forward.1} parent=5 // pred_check_branch
        %270 = sbr.rel (%p268) target = $region40
      $region39: #{res_block_forward.1} parent=5 // pred_region
        // Predicated region
        $region41: #{res_block_forward.1} parent=39 // pred_check
          %p271 = pneg %p46
        $region42: #{res_block_forward.1} parent=39 // pred_check_branch
          %273 = sbr.rel (%p271) target = $region44
        $region43: #{res_block_forward.1} parent=39 // pred_region
          %p274 = scmp.lt.s32.totalorder %s21, 1
          %s275 = scalar_select %p274, %s21, 1
          %s276 = smul.addr %s275, 54
          %s277 = smul.addr %s276, 4
          %s278 = scalar_lea.vmem %s0, %s277
        $region44: #{res_block_forward.1} parent=39 // pred_fallthru
          _
        // Predicated region
        $region45: #{res_block_forward.1} parent=39 // pred_check
          %p279 = pneg %p74
        $region46: #{res_block_forward.1} parent=39 // pred_check_branch
          %281 = sbr.rel (%p279) target = $region48
        $region47: #{res_block_forward.1} parent=39 // pred_region
          %s282 = sand.u32 %s64, 1
          %s283 = sand.u32 %s64, 1
          %s284 = smul.addr %s283, 16
          %s285 = scalar_lea.vmem [#allocation2], %s284
          %s286 = smul.addr %s21, 4
          %s287 = sadd.s32 %s22, %s286
          %s288 = smul.addr %s287, 8
          %s289 = scalar_lea.vmem %s1, %s288
          // Predicated region
          $region49: #{res_block_forward.1} parent=47 // pred_check
            _
          $region50: #{res_block_forward.1} parent=47 // pred_check_branch
            %291 = sbr.rel (0) target = $region52
          $region51: #{res_block_forward.1} parent=47 // pred_region
            // Predicated region
            $region53: #{res_block_forward.1} parent=51 // pred_check
              _
            $region54: #{res_block_forward.1} parent=51 // pred_check_branch
              %293 = sbr.rel (0) target = $region56
            $region55: #{res_block_forward.1} parent=51 // pred_region
              // Predicated region
              $region68: #{res_block_forward.1} parent=55 // pred_check
                _
              $region69: #{res_block_forward.1} parent=55 // pred_check_branch
                %310 = sbr.rel (0) target = $region71
              $region70: #{res_block_forward.1} parent=55 // pred_region
                loop: start=0, step=1, limit=1
                $region72: #{res_block_forward.1} parent=70 // loop_pre_header
                  _
                $region73: #{res_block_forward.1} parent=70 // loop_header
                  %s312 = sphi 0, %s316
                  %p313 = scmp.ge.s32.totalorder %s312, 1
                  %s317 = sphi %s289, %s289
                  %s318 = sphi %s285, %s285
                $region74: #{res_block_forward.1} parent=70 // loop_header_branch
                  %315 = sbr.rel (%p313) target = $region78
                $region75: #{res_block_forward.1} parent=70 // loop_body
                  %v319 = vld [vmem:[%s317] sm:$0xff]
                  %320 = vst [vmem:[%s318] sm:$0xff] %v319
                  %v321 = vld [vmem:[%s317 + $0x10] sm:$0xff]
                  %322 = vst [vmem:[%s318 + $0x8] sm:$0xff] %v321
                $region76: #{res_block_forward.1} parent=70 // loop_footer
                  %s316 = sadd.s32 1, %s312
                $region77: #{res_block_forward.1} parent=70 // loop_footer_branch
                  %311 = sbr.rel target = $region73
                $region78: #{res_block_forward.1} parent=70 // loop_exit
                  _
              $region71: #{res_block_forward.1} parent=55 // pred_fallthru
                _
              // Predicated region
              $region79: #{res_block_forward.1} parent=55 // pred_check
                _
              $region80: #{res_block_forward.1} parent=55 // pred_check_branch
                %324 = sbr.rel target = $region82
              $region81: #{res_block_forward.1} parent=55 // pred_region
                _
              $region82: #{res_block_forward.1} parent=55 // pred_fallthru
                _
            $region56: #{res_block_forward.1} parent=51 // pred_fallthru
              _
            // Predicated region
            $region57: #{res_block_forward.1} parent=51 // pred_check
              _
            $region58: #{res_block_forward.1} parent=51 // pred_check_branch
              %295 = sbr.rel target = $region60
            $region59: #{res_block_forward.1} parent=51 // pred_region
              loop: start=0, step=1, limit=1
              $region61: #{res_block_forward.1} parent=59 // loop_pre_header
                _
              $region62: #{res_block_forward.1} parent=59 // loop_header
                %s298 = sphi 0, %s302
                %p299 = scmp.ge.s32.totalorder %s298, 1
                %s303 = sphi %s289, %s289
                %s304 = sphi %s285, %s285
              $region63: #{res_block_forward.1} parent=59 // loop_header_branch
                %301 = sbr.rel (%p299) target = $region67
              $region64: #{res_block_forward.1} parent=59 // loop_body
                %v305 = vld [vmem:[%s303] sm:$0xff]
                %306 = vst [vmem:[%s304] sm:$0xff] %v305
                %v307 = vld [vmem:[%s303 + $0x10] sm:$0xff]
                %308 = vst [vmem:[%s304 + $0x8] sm:$0xff] %v307
              $region65: #{res_block_forward.1} parent=59 // loop_footer
                %s302 = sadd.s32 1, %s298
              $region66: #{res_block_forward.1} parent=59 // loop_footer_branch
                %297 = sbr.rel target = $region62
              $region67: #{res_block_forward.1} parent=59 // loop_exit
                _
            $region60: #{res_block_forward.1} parent=51 // pred_fallthru
              _
          $region52: #{res_block_forward.1} parent=47 // pred_fallthru
            _
          %325 = vnop
        $region48: #{res_block_forward.1} parent=39 // pred_fallthru
          _
      $region40: #{res_block_forward.1} parent=5 // pred_fallthru
        _
      %p326 = scmp.le.s32.totalorder 1, %s14
      %p327 = scmp.lt.s32.totalorder %s14, 5
      %p328 = pnand %p326, %p327
      %p329 = pneg %p328
      // Predicated region
      $region83: #{res_block_forward.1} parent=5 // pred_check
        _
      $region84: #{res_block_forward.1} parent=5 // pred_check_branch
        %331 = sbr.rel (%p328) target = $region86
      $region85: #{res_block_forward.1} parent=5 // pred_region
        %s332 = ssub.s32 %s14, 1
        %s333 = sand.u32 %s67, 1
        %s334 = sand.u32 %s67, 1
        %s335 = smul.addr %s334, 16
        %s336 = scalar_lea.vmem [#allocation2], %s335
        // Predicated region
        $region87: #{res_block_forward.1} parent=85 // pred_check
          %p337 = pneg %p80
        $region88: #{res_block_forward.1} parent=85 // pred_check_branch
          %339 = sbr.rel (%p337) target = $region90
        $region89: #{res_block_forward.1} parent=85 // pred_region
          _
        $region90: #{res_block_forward.1} parent=85 // pred_fallthru
          _
        %p340 = scmp.lt.s32.totalorder %s23, 1
        %s341 = scalar_select %p340, %s23, 1
        %s342 = smul.addr %s341, 54
        %s343 = smul.addr %s342, 4
        %s344 = scalar_lea.vmem %s0, %s343
        %p345 = pneg %p52
        %p346 = pneg %p49
        %s347 = sand.u32 %s67, 1
        %s348 = sand.u32 %s67, 1
        %s349 = smul.addr %s348, 16
        %s350 = scalar_lea.vmem [#allocation2], %s349
        %p351 = pneg %p80
        %p352 = pneg %p77
        %p353 = pneg %p101
        %p354 = pneg %p98
        %p355 = pneg %p122
        %p356 = pneg %p119
        %p357 = pneg %p143
        %p358 = pneg %p140
        %p359 = pneg %p164
        %p360 = pneg %p161
        %p361 = pneg %p185
        %p362 = pneg %p182
        %p363 = pneg %p206
        %p364 = pneg %p203
        %p365 = pneg %p234
        %p366 = pneg %p231
        %s367 = sand.u32 %s221, 1
        %s368 = sand.u32 %s221, 1
        %s369 = smul.addr %s368, 16
        %s370 = scalar_lea.vmem [#allocation3], %s369
        %p371 = scmp.lt.s32.totalorder %s23, 1
        %s372 = scalar_select %p371, %s23, 1
        %s373 = smul.addr %s372, 54
        %s374 = smul.addr %s373, 4
        %s375 = scalar_lea.vmem %s0, %s374
        %s376 = smul.u32 %s24, 8
        %s377 = smul.u32 %s376, 3
        %s378 = smul.addr %s377, 4
        %s379 = scalar_lea.vmem %s375, %s378
        %v380 = vld [vmem:[%s379] sm:$0xf]
        %v381 = vld [vmem:[%s379 + $0x4] sm:$0xf]
        %v382 = vld [vmem:[%s379 + $0x8] sm:$0xf]
        %v383 = vld [vmem:[%s379 + $0xc] sm:$0xf]
        %v384 = vld [vmem:[%s379 + $0x10] sm:$0xf]
        %v385 = vld [vmem:[%s379 + $0x14] sm:$0xf]
        %v386 = vld [vmem:[%s379 + $0x18] sm:$0xf]
        %v387 = vld [vmem:[%s379 + $0x1c] sm:$0xf]
        %v388 = vld [vmem:[%s379 + $0x20] sm:$0xf]
        %v389 = vld [vmem:[%s379 + $0x24] sm:$0xf]
        %v390 = vld [vmem:[%s379 + $0x28] sm:$0xf]
        %v391 = vld [vmem:[%s379 + $0x2c] sm:$0xf]
        %v392 = vld [vmem:[%s379 + $0x30] sm:$0xf]
        %v393 = vld [vmem:[%s379 + $0x34] sm:$0xf]
        %v394 = vld [vmem:[%s379 + $0x38] sm:$0xf]
        %v395 = vld [vmem:[%s379 + $0x3c] sm:$0xf]
        %v396 = vld [vmem:[%s379 + $0x40] sm:$0xf]
        %v397 = vld [vmem:[%s379 + $0x44] sm:$0xf]
        %v398 = vld [vmem:[%s379 + $0x48] sm:$0xf]
        %v399 = vld [vmem:[%s379 + $0x4c] sm:$0xf]
        %v400 = vld [vmem:[%s379 + $0x50] sm:$0xf]
        %v401 = vld [vmem:[%s379 + $0x54] sm:$0xf]
        %v402 = vld [vmem:[%s379 + $0x58] sm:$0xf]
        %v403 = vld [vmem:[%s379 + $0x5c] sm:$0xf]
        %v404 = vld [vmem:[%s379 + $0x60] sm:$0xf]
        %v405 = vld [vmem:[%s379 + $0x64] sm:$0xf]
        %v406 = vld [vmem:[%s379 + $0x68] sm:$0xf]
        %v407 = vld [vmem:[%s379 + $0x6c] sm:$0xf]
        %v408 = vld [vmem:[%s379 + $0x70] sm:$0xf]
        %v409 = vld [vmem:[%s379 + $0x74] sm:$0xf]
        %v410 = vunpack.c.l.bf16 %v380
        %v411 = vunpack.c.l.bf16 %v381
        %v412 = vunpack.c.l.bf16 %v382
        %v413 = vunpack.c.l.bf16 %v383
        %v414 = vunpack.c.l.bf16 %v384
        %v415 = vunpack.c.l.bf16 %v385
        %v416 = vunpack.c.l.bf16 %v386
        %v417 = vunpack.c.l.bf16 %v387
        %v418 = vunpack.c.l.bf16 %v388
        %v419 = vunpack.c.l.bf16 %v389
        %v420 = vunpack.c.l.bf16 %v390
        %v421 = vunpack.c.l.bf16 %v391
        %v422 = vunpack.c.l.bf16 %v392
        %v423 = vunpack.c.l.bf16 %v393
        %v424 = vunpack.c.l.bf16 %v394
        %v425 = vunpack.c.l.bf16 %v395
        %v426 = vunpack.c.l.bf16 %v396
        %v427 = vunpack.c.l.bf16 %v397
        %v428 = vunpack.c.l.bf16 %v398
        %v429 = vunpack.c.l.bf16 %v399
        %v430 = vunpack.c.l.bf16 %v400
        %v431 = vunpack.c.l.bf16 %v401
        %v432 = vunpack.c.l.bf16 %v402
        %v433 = vunpack.c.l.bf16 %v403
        %v434 = vunpack.c.l.bf16 %v404
        %v435 = vunpack.c.l.bf16 %v405
        %v436 = vunpack.c.l.bf16 %v406
        %v437 = vunpack.c.l.bf16 %v407
        %v438 = vunpack.c.l.bf16 %v408
        %v439 = vunpack.c.l.bf16 %v409
        %v440 = vld [vmem:[%s2] sm:$0xf]
        %v441 = vld [vmem:[%s2 + $0x4] sm:$0xf]
        %v442 = vunpack.c.l.bf16 %v440
        %v443 = vunpack.c.l.bf16 %v441
        %v444 = vld [vmem:[%s3] sm:$0x1]
        %v446 = vlaneseq
        %v447 = vshrl.u32 %v446, 7
        %v448 = vsub.s32 0, %v447
        %v449 = vrot.slane %v444, %v448
        %vm451 = vcmask 130048
        %v453 = vsel %vm451, %v410, 0
        %v456 = vsel %vm451, %v411, 0
        %v459 = vsel %vm451, %v412, 0
        %v462 = vsel %vm451, %v413, 0
        %v465 = vsel %vm451, %v414, 0
        %v468 = vsel %vm451, %v415, 0
        %v471 = vsel %vm451, %v416, 0
        %v474 = vsel %vm451, %v417, 0
        %v477 = vsel %vm451, %v418, 0
        %v480 = vsel %vm451, %v419, 0
        %v483 = vsel %vm451, %v420, 0
        %v486 = vsel %vm451, %v421, 0
        %v489 = vsel %vm451, %v422, 0
        %v492 = vsel %vm451, %v423, 0
        %v495 = vsel %vm451, %v424, 0
        %v498 = vsel %vm451, %v425, 0
        %v501 = vsel %vm451, %v426, 0
        %v504 = vsel %vm451, %v427, 0
        %v507 = vsel %vm451, %v428, 0
        %v510 = vsel %vm451, %v429, 0
        %v513 = vsel %vm451, %v430, 0
        %v516 = vsel %vm451, %v431, 0
        %v519 = vsel %vm451, %v432, 0
        %v522 = vsel %vm451, %v433, 0
        %v525 = vsel %vm451, %v434, 0
        %v528 = vsel %vm451, %v435, 0
        %v531 = vsel %vm451, %v436, 0
        %v534 = vsel %vm451, %v437, 0
        %v537 = vsel %vm451, %v438, 0
        %v540 = vsel %vm451, %v439, 0
        %542 = vmatprep.subr.mxu0 0.0
        %543 = vmatpush1.msra.mxu0 %v442
        %544 = vmatprep.subr.mxu0 0.0
        %545 = vmatpush1.msra.mxu0 %v443
        %546 = vmatprep.subr.mxu0 0.0
        %547 = vmatpush1.msra.mxu0 0.0
        %548 = vmatprep.subr.mxu0 0.0
        %549 = vmatpush1.msra.mxu0 0.0
        %550 = vmatprep.subr.mxu0 0.0
        %551 = vmatpush1.msra.mxu0 0.0
        %552 = vmatprep.subr.mxu0 0.0
        %553 = vmatpush1.msra.mxu0 0.0
        %554 = vmatprep.subr.mxu0 0.0
        %555 = vmatpush1.msra.mxu0 0.0
        %556 = vmatprep.subr.mxu0 0.0
        %557 = vmatpush1.msra.mxu0 0.0
        %558 = vmatprep.subr.mxu0 0.0
        %559 = vmatpush1.msra.mxu0 0.0
        %560 = vmatprep.subr.mxu0 0.0
        %561 = vmatpush1.msra.mxu0 0.0
        %562 = vmatprep.subr.mxu0 0.0
        %563 = vmatpush1.msra.mxu0 0.0
        %564 = vmatprep.subr.mxu0 0.0
        %565 = vmatpush1.msra.mxu0 0.0
        %566 = vmatprep.subr.mxu0 0.0
        %567 = vmatpush1.msra.mxu0 0.0
        %568 = vmatprep.subr.mxu0 0.0
        %569 = vmatpush1.msra.mxu0 0.0
        %570 = vmatprep.subr.mxu0 0.0
        %571 = vmatpush1.msra.mxu0 0.0
        %572 = vmatprep.subr.mxu0 0.0
        %573 = vmatpush1.msra.mxu0 0.0
        %574 = vmatprep.subr.mxu0 0.0
        %575 = vmatpush1.msra.mxu0 0.0
        %576 = vmatprep.subr.mxu0 0.0
        %577 = vmatpush1.msra.mxu0 0.0
        %578 = vmatprep.subr.mxu0 0.0
        %579 = vmatpush1.msra.mxu0 0.0
        %580 = vmatprep.subr.mxu0 0.0
        %581 = vmatpush1.msra.mxu0 0.0
        %582 = vmatprep.subr.mxu0 0.0
        %583 = vmatpush1.msra.mxu0 0.0
        %584 = vmatprep.subr.mxu0 0.0
        %585 = vmatpush1.msra.mxu0 0.0
        %586 = vmatprep.subr.mxu0 0.0
        %587 = vmatpush1.msra.mxu0 0.0
        %588 = vmatprep.subr.mxu0 0.0
        %589 = vmatpush1.msra.mxu0 0.0
        %590 = vmatprep.subr.mxu0 0.0
        %591 = vmatpush1.msra.mxu0 0.0
        %592 = vmatprep.subr.mxu0 0.0
        %593 = vmatpush1.msra.mxu0 0.0
        %594 = vmatprep.subr.mxu0 0.0
        %595 = vmatpush1.msra.mxu0 0.0
        %596 = vmatprep.subr.mxu0 0.0
        %597 = vmatpush1.msra.mxu0 0.0
        %598 = vmatprep.subr.mxu0 0.0
        %599 = vmatpush1.msra.mxu0 0.0
        %600 = vmatprep.subr.mxu0 0.0
        %601 = vmatpush1.msra.mxu0 0.0
        %602 = vmatprep.subr.mxu0 0.0
        %603 = vmatpush1.msra.mxu0 0.0
        %604 = vmatprep.subr.mxu0 0.0
        %605 = vmatpush1.msra.mxu0 0.0
        %606 = vmatprep.mubr.f32.mxu0 0.0
        %607 = vmatmul.mubr.f32.gmra.mrb[0].mxu0 %v453
        %v608 = vpop.f32.mrb[0].mxu0
        %v609 = vadd.f32 %v449, %v608
        %v610 = vpop.f32.mrb[0].mxu0
        %611 = vmatprep.mubr.f32.mxu0 0.0
        %612 = vmatmul.mubr.f32.gmra.mrb[0].mxu0 %v456
        %v613 = vpop.f32.mrb[0].mxu0
        %v614 = vadd.f32 %v449, %v613
        %v615 = vpop.f32.mrb[0].mxu0
        %616 = vmatprep.mubr.f32.mxu0 0.0
        %617 = vmatmul.mubr.f32.gmra.mrb[0].mxu0 %v459
        %v618 = vpop.f32.mrb[0].mxu0
        %v619 = vadd.f32 %v449, %v618
        %v620 = vpop.f32.mrb[0].mxu0
        %621 = vmatprep.mubr.f32.mxu0 0.0
        %622 = vmatmul.mubr.f32.gmra.mrb[0].mxu0 %v462
        %v623 = vpop.f32.mrb[0].mxu0
        %v624 = vadd.f32 %v449, %v623
        %v625 = vpop.f32.mrb[0].mxu0
        %626 = vmatprep.mubr.f32.mxu0 0.0
        %627 = vmatmul.mubr.f32.gmra.mrb[0].mxu0 %v465
        %v628 = vpop.f32.mrb[0].mxu0
        %v629 = vadd.f32 %v449, %v628
        %v630 = vpop.f32.mrb[0].mxu0
        %631 = vmatprep.mubr.f32.mxu0 0.0
        %632 = vmatmul.mubr.f32.gmra.mrb[0].mxu0 %v468
        %v633 = vpop.f32.mrb[0].mxu0
        %v634 = vadd.f32 %v449, %v633
        %v635 = vpop.f32.mrb[0].mxu0
        %636 = vmatprep.mubr.f32.mxu0 0.0
        %637 = vmatmul.mubr.f32.gmra.mrb[0].mxu0 %v471
        %v638 = vpop.f32.mrb[0].mxu0
        %v639 = vadd.f32 %v449, %v638
        %v640 = vpop.f32.mrb[0].mxu0
        %641 = vmatprep.mubr.f32.mxu0 0.0
        %642 = vmatmul.mubr.f32.gmra.mrb[0].mxu0 %v474
        %v643 = vpop.f32.mrb[0].mxu0
        %v644 = vadd.f32 %v449, %v643
        %v645 = vpop.f32.mrb[0].mxu0
        %646 = vmatprep.mubr.f32.mxu0 0.0
        %647 = vmatmul.mubr.f32.gmra.mrb[0].mxu0 %v477
        %v648 = vpop.f32.mrb[0].mxu0
        %v649 = vadd.f32 %v449, %v648
        %v650 = vpop.f32.mrb[0].mxu0
        %651 = vmatprep.mubr.f32.mxu0 0.0
        %652 = vmatmul.mubr.f32.gmra.mrb[0].mxu0 %v480
        %v653 = vpop.f32.mrb[0].mxu0
        %v654 = vadd.f32 %v449, %v653
        %v655 = vpop.f32.mrb[0].mxu0
        %656 = vmatprep.mubr.f32.mxu0 0.0
        %657 = vmatmul.mubr.f32.gmra.mrb[0].mxu0 %v483
        %v658 = vpop.f32.mrb[0].mxu0
        %v659 = vadd.f32 %v449, %v658
        %v660 = vpop.f32.mrb[0].mxu0
        %661 = vmatprep.mubr.f32.mxu0 0.0
        %662 = vmatmul.mubr.f32.gmra.mrb[0].mxu0 %v486
        %v663 = vpop.f32.mrb[0].mxu0
        %v664 = vadd.f32 %v449, %v663
        %v665 = vpop.f32.mrb[0].mxu0
        %666 = vmatprep.mubr.f32.mxu0 0.0
        %667 = vmatmul.mubr.f32.gmra.mrb[0].mxu0 %v489
        %v668 = vpop.f32.mrb[0].mxu0
        %v669 = vadd.f32 %v449, %v668
        %v670 = vpop.f32.mrb[0].mxu0
        %671 = vmatprep.mubr.f32.mxu0 0.0
        %672 = vmatmul.mubr.f32.gmra.mrb[0].mxu0 %v492
        %v673 = vpop.f32.mrb[0].mxu0
        %v674 = vadd.f32 %v449, %v673
        %v675 = vpop.f32.mrb[0].mxu0
        %676 = vmatprep.mubr.f32.mxu0 0.0
        %677 = vmatmul.mubr.f32.gmra.mrb[0].mxu0 %v495
        %v678 = vpop.f32.mrb[0].mxu0
        %v679 = vadd.f32 %v449, %v678
        %v680 = vpop.f32.mrb[0].mxu0
        %681 = vmatprep.mubr.f32.mxu0 0.0
        %682 = vmatmul.mubr.f32.gmra.mrb[0].mxu0 %v498
        %v683 = vpop.f32.mrb[0].mxu0
        %v684 = vadd.f32 %v449, %v683
        %v685 = vpop.f32.mrb[0].mxu0
        %686 = vmatprep.mubr.f32.mxu0 0.0
        %687 = vmatmul.mubr.f32.gmra.mrb[0].mxu0 %v501
        %v688 = vpop.f32.mrb[0].mxu0
        %v689 = vadd.f32 %v449, %v688
        %v690 = vpop.f32.mrb[0].mxu0
        %691 = vmatprep.mubr.f32.mxu0 0.0
        %692 = vmatmul.mubr.f32.gmra.mrb[0].mxu0 %v504
        %v693 = vpop.f32.mrb[0].mxu0
        %v694 = vadd.f32 %v449, %v693
        %v695 = vpop.f32.mrb[0].mxu0
        %696 = vmatprep.mubr.f32.mxu0 0.0
        %697 = vmatmul.mubr.f32.gmra.mrb[0].mxu0 %v507
        %v698 = vpop.f32.mrb[0].mxu0
        %v699 = vadd.f32 %v449, %v698
        %v700 = vpop.f32.mrb[0].mxu0
        %701 = vmatprep.mubr.f32.mxu0 0.0
        %702 = vmatmul.mubr.f32.gmra.mrb[0].mxu0 %v510
        %v703 = vpop.f32.mrb[0].mxu0
        %v704 = vadd.f32 %v449, %v703
        %v705 = vpop.f32.mrb[0].mxu0
        %706 = vmatprep.mubr.f32.mxu0 0.0
        %707 = vmatmul.mubr.f32.gmra.mrb[0].mxu0 %v513
        %v708 = vpop.f32.mrb[0].mxu0
        %v709 = vadd.f32 %v449, %v708
        %v710 = vpop.f32.mrb[0].mxu0
        %711 = vmatprep.mubr.f32.mxu0 0.0
        %712 = vmatmul.mubr.f32.gmra.mrb[0].mxu0 %v516
        %v713 = vpop.f32.mrb[0].mxu0
        %v714 = vadd.f32 %v449, %v713
        %v715 = vpop.f32.mrb[0].mxu0
        %716 = vmatprep.mubr.f32.mxu0 0.0
        %717 = vmatmul.mubr.f32.gmra.mrb[0].mxu0 %v519
        %v718 = vpop.f32.mrb[0].mxu0
        %v719 = vadd.f32 %v449, %v718
        %v720 = vpop.f32.mrb[0].mxu0
        %721 = vmatprep.mubr.f32.mxu0 0.0
        %722 = vmatmul.mubr.f32.gmra.mrb[0].mxu0 %v522
        %v723 = vpop.f32.mrb[0].mxu0
        %v724 = vadd.f32 %v449, %v723
        %v725 = vpop.f32.mrb[0].mxu0
        %726 = vmatprep.mubr.f32.mxu0 0.0
        %727 = vmatmul.mubr.f32.gmra.mrb[0].mxu0 %v525
        %v728 = vpop.f32.mrb[0].mxu0
        %v729 = vadd.f32 %v449, %v728
        %v730 = vpop.f32.mrb[0].mxu0
        %731 = vmatprep.mubr.f32.mxu0 0.0
        %732 = vmatmul.mubr.f32.gmra.mrb[0].mxu0 %v528
        %v733 = vpop.f32.mrb[0].mxu0
        %v734 = vadd.f32 %v449, %v733
        %v735 = vpop.f32.mrb[0].mxu0
        %736 = vmatprep.mubr.f32.mxu0 0.0
        %737 = vmatmul.mubr.f32.gmra.mrb[0].mxu0 %v531
        %v738 = vpop.f32.mrb[0].mxu0
        %v739 = vadd.f32 %v449, %v738
        %v740 = vpop.f32.mrb[0].mxu0
        %741 = vmatprep.mubr.f32.mxu0 0.0
        %742 = vmatmul.mubr.f32.gmra.mrb[0].mxu0 %v534
        %v743 = vpop.f32.mrb[0].mxu0
        %v744 = vadd.f32 %v449, %v743
        %v745 = vpop.f32.mrb[0].mxu0
        %746 = vmatprep.mubr.f32.mxu0 0.0
        %747 = vmatmul.mubr.f32.gmra.mrb[0].mxu0 %v537
        %v748 = vpop.f32.mrb[0].mxu0
        %v749 = vadd.f32 %v449, %v748
        %v750 = vpop.f32.mrb[0].mxu0
        %751 = vmatprep.mubr.f32.mxu0 0.0
        %752 = vmatmul.mubr.f32.gmra.mrb[0].mxu0 %v540
        %v753 = vpop.f32.mrb[0].mxu0
        %v754 = vadd.f32 %v449, %v753
        %v755 = vpop.f32.mrb[0].mxu0
        %756 = vdwg.mxu0
        %v757 = vmax.f32 %v609, 0.0
        %v758 = vmax.f32 %v614, 0.0
        %v759 = vmax.f32 %v619, 0.0
        %v760 = vmax.f32 %v624, 0.0
        %v761 = vmax.f32 %v629, 0.0
        %v762 = vmax.f32 %v634, 0.0
        %v763 = vmax.f32 %v639, 0.0
        %v764 = vmax.f32 %v644, 0.0
        %v765 = vmax.f32 %v649, 0.0
        %v766 = vmax.f32 %v654, 0.0
        %v767 = vmax.f32 %v659, 0.0
        %v768 = vmax.f32 %v664, 0.0
        %v769 = vmax.f32 %v669, 0.0
        %v770 = vmax.f32 %v674, 0.0
        %v771 = vmax.f32 %v679, 0.0
        %v772 = vmax.f32 %v684, 0.0
        %v773 = vmax.f32 %v689, 0.0
        %v774 = vmax.f32 %v694, 0.0
        %v775 = vmax.f32 %v699, 0.0
        %v776 = vmax.f32 %v704, 0.0
        %v777 = vmax.f32 %v709, 0.0
        %v778 = vmax.f32 %v714, 0.0
        %v779 = vmax.f32 %v719, 0.0
        %v780 = vmax.f32 %v724, 0.0
        %v781 = vmax.f32 %v729, 0.0
        %v782 = vmax.f32 %v734, 0.0
        %v783 = vmax.f32 %v739, 0.0
        %v784 = vmax.f32 %v744, 0.0
        %v785 = vmax.f32 %v749, 0.0
        %v786 = vmax.f32 %v754, 0.0
        %v787 = vstv %s376
        %v788 = vadd.s32 %v787, 1
        %v789 = vadd.s32 %v787, 2
        %v790 = vadd.s32 %v787, 3
        %v791 = vadd.s32 %v787, 4
        %v792 = vadd.s32 %v787, 5
        %v793 = vadd.s32 %v787, 6
        %v794 = vadd.s32 %v787, 7
        %v795 = vadd.s32 %v787, 8
        %v796 = vadd.s32 %v787, 9
        %v797 = vlaneseq
        %v798 = vshrl.u32 %v797, 7
        %v799 = vadd.s32 %v798, 8
        %v800 = vadd.s32 %v798, 16
        %vm801 = vcmp.ge.s32.totalorder %v787, 1
        %vm802 = vcmp.ge.s32.totalorder %v788, 1
        %vm803 = vcmp.ge.s32.totalorder %v789, 1
        %vm804 = vcmp.ge.s32.totalorder %v790, 1
        %vm805 = vcmp.ge.s32.totalorder %v791, 1
        %vm806 = vcmp.ge.s32.totalorder %v792, 1
        %vm807 = vcmp.ge.s32.totalorder %v793, 1
        %vm808 = vcmp.ge.s32.totalorder %v794, 1
        %vm809 = vcmp.ge.s32.totalorder %v795, 1
        %vm810 = vcmp.ge.s32.totalorder %v796, 1
        %vm811 = vcmp.le.s32.totalorder %v787, 16
        %vm812 = vcmp.le.s32.totalorder %v788, 16
        %vm813 = vcmp.le.s32.totalorder %v789, 16
        %vm814 = vcmp.le.s32.totalorder %v790, 16
        %vm815 = vcmp.le.s32.totalorder %v791, 16
        %vm816 = vcmp.le.s32.totalorder %v792, 16
        %vm817 = vcmp.le.s32.totalorder %v793, 16
        %vm818 = vcmp.le.s32.totalorder %v794, 16
        %vm819 = vcmp.le.s32.totalorder %v795, 16
        %vm820 = vcmp.le.s32.totalorder %v796, 16
        %vm821 = vmand %vm801, %vm811
        %vm822 = vmand %vm802, %vm812
        %vm823 = vmand %vm803, %vm813
        %vm824 = vmand %vm804, %vm814
        %vm825 = vmand %vm805, %vm815
        %vm826 = vmand %vm806, %vm816
        %vm827 = vmand %vm807, %vm817
        %vm828 = vmand %vm808, %vm818
        %vm829 = vmand %vm809, %vm819
        %vm830 = vmand %vm810, %vm820
        %vm831 = vcmp.ge.s32.totalorder %v798, 1
        %vm832 = vcmp.ge.s32.totalorder %v799, 1
        %vm833 = vcmp.ge.s32.totalorder %v800, 1
        %vm834 = vmand %vm821, %vm831
        %vm835 = vmand %vm821, %vm832
        %vm836 = vmand %vm821, %vm833
        %vm837 = vmand %vm822, %vm831
        %vm838 = vmand %vm822, %vm832
        %vm839 = vmand %vm822, %vm833
        %vm840 = vmand %vm823, %vm831
        %vm841 = vmand %vm823, %vm832
        %vm842 = vmand %vm823, %vm833
        %vm843 = vmand %vm824, %vm831
        %vm844 = vmand %vm824, %vm832
        %vm845 = vmand %vm824, %vm833
        %vm846 = vmand %vm825, %vm831
        %vm847 = vmand %vm825, %vm832
        %vm848 = vmand %vm825, %vm833
        %vm849 = vmand %vm826, %vm831
        %vm850 = vmand %vm826, %vm832
        %vm851 = vmand %vm826, %vm833
        %vm852 = vmand %vm827, %vm831
        %vm853 = vmand %vm827, %vm832
        %vm854 = vmand %vm827, %vm833
        %vm855 = vmand %vm828, %vm831
        %vm856 = vmand %vm828, %vm832
        %vm857 = vmand %vm828, %vm833
        %vm858 = vmand %vm829, %vm831
        %vm859 = vmand %vm829, %vm832
        %vm860 = vmand %vm829, %vm833
        %vm861 = vmand %vm830, %vm831
        %vm862 = vmand %vm830, %vm832
        %vm863 = vmand %vm830, %vm833
        %vm864 = vcmp.le.s32.totalorder %v798, 16
        %vm865 = vcmp.le.s32.totalorder %v799, 16
        %vm866 = vcmp.le.s32.totalorder %v800, 16
        %vm867 = vmand %vm834, %vm864
        %vm868 = vmand %vm835, %vm865
        %vm869 = vmand %vm836, %vm866
        %vm870 = vmand %vm837, %vm864
        %vm871 = vmand %vm838, %vm865
        %vm872 = vmand %vm839, %vm866
        %vm873 = vmand %vm840, %vm864
        %vm874 = vmand %vm841, %vm865
        %vm875 = vmand %vm842, %vm866
        %vm876 = vmand %vm843, %vm864
        %vm877 = vmand %vm844, %vm865
        %vm878 = vmand %vm845, %vm866
        %vm879 = vmand %vm846, %vm864
        %vm880 = vmand %vm847, %vm865
        %vm881 = vmand %vm848, %vm866
        %vm882 = vmand %vm849, %vm864
        %vm883 = vmand %vm850, %vm865
        %vm884 = vmand %vm851, %vm866
        %vm885 = vmand %vm852, %vm864
        %vm886 = vmand %vm853, %vm865
        %vm887 = vmand %vm854, %vm866
        %vm888 = vmand %vm855, %vm864
        %vm889 = vmand %vm856, %vm865
        %vm890 = vmand %vm857, %vm866
        %vm891 = vmand %vm858, %vm864
        %vm892 = vmand %vm859, %vm865
        %vm893 = vmand %vm860, %vm866
        %vm894 = vmand %vm861, %vm864
        %vm895 = vmand %vm862, %vm865
        %vm896 = vmand %vm863, %vm866
        %v897 = vsel %vm867, 1, 0
        %v898 = vsel %vm868, 1, 0
        %v899 = vsel %vm869, 1, 0
        %v900 = vsel %vm870, 1, 0
        %v901 = vsel %vm871, 1, 0
        %v902 = vsel %vm872, 1, 0
        %v903 = vsel %vm873, 1, 0
        %v904 = vsel %vm874, 1, 0
        %v905 = vsel %vm875, 1, 0
        %v906 = vsel %vm876, 1, 0
        %v907 = vsel %vm877, 1, 0
        %v908 = vsel %vm878, 1, 0
        %v909 = vsel %vm879, 1, 0
        %v910 = vsel %vm880, 1, 0
        %v911 = vsel %vm881, 1, 0
        %v912 = vsel %vm882, 1, 0
        %v913 = vsel %vm883, 1, 0
        %v914 = vsel %vm884, 1, 0
        %v915 = vsel %vm885, 1, 0
        %v916 = vsel %vm886, 1, 0
        %v917 = vsel %vm887, 1, 0
        %v918 = vsel %vm888, 1, 0
        %v919 = vsel %vm889, 1, 0
        %v920 = vsel %vm890, 1, 0
        %v921 = vsel %vm891, 1, 0
        %v922 = vsel %vm892, 1, 0
        %v923 = vsel %vm893, 1, 0
        %v924 = vsel %vm894, 1, 0
        %v925 = vsel %vm895, 1, 0
        %v926 = vsel %vm896, 1, 0
        %vm927 = vcmp.eq.s32.totalorder %v897, 1
        %vm928 = vcmp.eq.s32.totalorder %v898, 1
        %vm929 = vcmp.eq.s32.totalorder %v899, 1
        %vm930 = vcmp.eq.s32.totalorder %v900, 1
        %vm931 = vcmp.eq.s32.totalorder %v901, 1
        %vm932 = vcmp.eq.s32.totalorder %v902, 1
        %vm933 = vcmp.eq.s32.totalorder %v903, 1
        %vm934 = vcmp.eq.s32.totalorder %v904, 1
        %vm935 = vcmp.eq.s32.totalorder %v905, 1
        %vm936 = vcmp.eq.s32.totalorder %v906, 1
        %vm937 = vcmp.eq.s32.totalorder %v907, 1
        %vm938 = vcmp.eq.s32.totalorder %v908, 1
        %vm939 = vcmp.eq.s32.totalorder %v909, 1
        %vm940 = vcmp.eq.s32.totalorder %v910, 1
        %vm941 = vcmp.eq.s32.totalorder %v911, 1
        %vm942 = vcmp.eq.s32.totalorder %v912, 1
        %vm943 = vcmp.eq.s32.totalorder %v913, 1
        %vm944 = vcmp.eq.s32.totalorder %v914, 1
        %vm945 = vcmp.eq.s32.totalorder %v915, 1
        %vm946 = vcmp.eq.s32.totalorder %v916, 1
        %vm947 = vcmp.eq.s32.totalorder %v917, 1
        %vm948 = vcmp.eq.s32.totalorder %v918, 1
        %vm949 = vcmp.eq.s32.totalorder %v919, 1
        %vm950 = vcmp.eq.s32.totalorder %v920, 1
        %vm951 = vcmp.eq.s32.totalorder %v921, 1
        %vm952 = vcmp.eq.s32.totalorder %v922, 1
        %vm953 = vcmp.eq.s32.totalorder %v923, 1
        %vm954 = vcmp.eq.s32.totalorder %v924, 1
        %vm955 = vcmp.eq.s32.totalorder %v925, 1
        %vm956 = vcmp.eq.s32.totalorder %v926, 1
        %v957 = vsel %vm927, %v757, 0.0
        %v958 = vsel %vm928, %v758, 0.0
        %v959 = vsel %vm929, %v759, 0.0
        %v960 = vsel %vm930, %v760, 0.0
        %v961 = vsel %vm931, %v761, 0.0
        %v962 = vsel %vm932, %v762, 0.0
        %v963 = vsel %vm933, %v763, 0.0
        %v964 = vsel %vm934, %v764, 0.0
        %v965 = vsel %vm935, %v765, 0.0
        %v966 = vsel %vm936, %v766, 0.0
        %v967 = vsel %vm937, %v767, 0.0
        %v968 = vsel %vm938, %v768, 0.0
        %v969 = vsel %vm939, %v769, 0.0
        %v970 = vsel %vm940, %v770, 0.0
        %v971 = vsel %vm941, %v771, 0.0
        %v972 = vsel %vm942, %v772, 0.0
        %v973 = vsel %vm943, %v773, 0.0
        %v974 = vsel %vm944, %v774, 0.0
        %v975 = vsel %vm945, %v775, 0.0
        %v976 = vsel %vm946, %v776, 0.0
        %v977 = vsel %vm947, %v777, 0.0
        %v978 = vsel %vm948, %v778, 0.0
        %v979 = vsel %vm949, %v779, 0.0
        %v980 = vsel %vm950, %v780, 0.0
        %v981 = vsel %vm951, %v781, 0.0
        %v982 = vsel %vm952, %v782, 0.0
        %v983 = vsel %vm953, %v783, 0.0
        %v984 = vsel %vm954, %v784, 0.0
        %v985 = vsel %vm955, %v785, 0.0
        %v986 = vsel %vm956, %v786, 0.0
        %vm1011 = vcmask 1046528
        %v1012 = vrot.slane %v957, 1
        %v1013 = vrot.slane %v958, 1
        %v1014 = vsel %vm1011, %v1012, %v1013
        %v1015 = vrot.slane %v959, 1
        %v1016 = vsel %vm1011, %v1013, %v1015
        %v1017 = vrot.slane %v960, 1
        %v1018 = vrot.slane %v961, 1
        %v1019 = vsel %vm1011, %v1017, %v1018
        %v1020 = vrot.slane %v962, 1
        %v1021 = vsel %vm1011, %v1018, %v1020
        %v1022 = vrot.slane %v963, 1
        %v1023 = vrot.slane %v964, 1
        %v1024 = vsel %vm1011, %v1022, %v1023
        %v1025 = vrot.slane %v965, 1
        %v1026 = vsel %vm1011, %v1023, %v1025
        %v1027 = vrot.slane %v966, 1
        %v1028 = vrot.slane %v967, 1
        %v1029 = vsel %vm1011, %v1027, %v1028
        %v1030 = vrot.slane %v968, 1
        %v1031 = vsel %vm1011, %v1028, %v1030
        %v1032 = vrot.slane %v969, 1
        %v1033 = vrot.slane %v970, 1
        %v1034 = vsel %vm1011, %v1032, %v1033
        %v1035 = vrot.slane %v971, 1
        %v1036 = vsel %vm1011, %v1033, %v1035
        %v1037 = vrot.slane %v972, 1
        %v1038 = vrot.slane %v973, 1
        %v1039 = vsel %vm1011, %v1037, %v1038
        %v1040 = vrot.slane %v974, 1
        %v1041 = vsel %vm1011, %v1038, %v1040
        %v1042 = vrot.slane %v975, 1
        %v1043 = vrot.slane %v976, 1
        %v1044 = vsel %vm1011, %v1042, %v1043
        %v1045 = vrot.slane %v977, 1
        %v1046 = vsel %vm1011, %v1043, %v1045
        %v1047 = vrot.slane %v978, 1
        %v1048 = vrot.slane %v979, 1
        %v1049 = vsel %vm1011, %v1047, %v1048
        %v1050 = vrot.slane %v980, 1
        %v1051 = vsel %vm1011, %v1048, %v1050
        %1052 = vrot.lane.b32.xlu0 %v1014, 4
        %v1053 = vpop.permute.xlu0 %1052
        %1054 = vrot.lane.b32.xlu0 %v1016, 4
        %v1055 = vpop.permute.xlu0 %1054
        %1056 = vrot.lane.b32.xlu0 %v1019, 4
        %v1057 = vpop.permute.xlu0 %1056
        %1058 = vrot.lane.b32.xlu0 %v1021, 4
        %v1059 = vpop.permute.xlu0 %1058
        %1060 = vrot.lane.b32.xlu0 %v1024, 4
        %v1061 = vpop.permute.xlu0 %1060
        %1062 = vrot.lane.b32.xlu0 %v1026, 4
        %v1063 = vpop.permute.xlu0 %1062
        %1064 = vrot.lane.b32.xlu0 %v1029, 4
        %v1065 = vpop.permute.xlu0 %1064
        %1066 = vrot.lane.b32.xlu0 %v1031, 4
        %v1067 = vpop.permute.xlu0 %1066
        %1068 = vrot.lane.b32.xlu0 %v1034, 4
        %v1069 = vpop.permute.xlu0 %1068
        %1070 = vrot.lane.b32.xlu0 %v1036, 4
        %v1071 = vpop.permute.xlu0 %1070
        %1072 = vrot.lane.b32.xlu0 %v1039, 4
        %v1073 = vpop.permute.xlu0 %1072
        %1074 = vrot.lane.b32.xlu0 %v1041, 4
        %v1075 = vpop.permute.xlu0 %1074
        %1076 = vrot.lane.b32.xlu0 %v1044, 4
        %v1077 = vpop.permute.xlu0 %1076
        %1078 = vrot.lane.b32.xlu0 %v1046, 4
        %v1079 = vpop.permute.xlu0 %1078
        %1080 = vrot.lane.b32.xlu0 %v1049, 4
        %v1081 = vpop.permute.xlu0 %1080
        %1082 = vrot.lane.b32.xlu0 %v1051, 4
        %v1083 = vpop.permute.xlu0 %1082
        %vm1100 = vcmask 1045504
        %v1101 = vrot.slane %v957, 2
        %v1102 = vrot.slane %v958, 2
        %v1103 = vsel %vm1100, %v1101, %v1102
        %v1104 = vrot.slane %v959, 2
        %v1105 = vsel %vm1100, %v1102, %v1104
        %v1106 = vrot.slane %v960, 2
        %v1107 = vrot.slane %v961, 2
        %v1108 = vsel %vm1100, %v1106, %v1107
        %v1109 = vrot.slane %v962, 2
        %v1110 = vsel %vm1100, %v1107, %v1109
        %v1111 = vrot.slane %v963, 2
        %v1112 = vrot.slane %v964, 2
        %v1113 = vsel %vm1100, %v1111, %v1112
        %v1114 = vrot.slane %v965, 2
        %v1115 = vsel %vm1100, %v1112, %v1114
        %v1116 = vrot.slane %v966, 2
        %v1117 = vrot.slane %v967, 2
        %v1118 = vsel %vm1100, %v1116, %v1117
        %v1119 = vrot.slane %v968, 2
        %v1120 = vsel %vm1100, %v1117, %v1119
        %v1121 = vrot.slane %v969, 2
        %v1122 = vrot.slane %v970, 2
        %v1123 = vsel %vm1100, %v1121, %v1122
        %v1124 = vrot.slane %v971, 2
        %v1125 = vsel %vm1100, %v1122, %v1124
        %v1126 = vrot.slane %v972, 2
        %v1127 = vrot.slane %v973, 2
        %v1128 = vsel %vm1100, %v1126, %v1127
        %v1129 = vrot.slane %v974, 2
        %v1130 = vsel %vm1100, %v1127, %v1129
        %v1131 = vrot.slane %v975, 2
        %v1132 = vrot.slane %v976, 2
        %v1133 = vsel %vm1100, %v1131, %v1132
        %v1134 = vrot.slane %v977, 2
        %v1135 = vsel %vm1100, %v1132, %v1134
        %v1136 = vrot.slane %v978, 2
        %v1137 = vrot.slane %v979, 2
        %v1138 = vsel %vm1100, %v1136, %v1137
        %v1139 = vrot.slane %v980, 2
        %v1140 = vsel %vm1100, %v1137, %v1139
        %1141 = vrot.lane.b32.xlu0 %v1103, 8
        %v1142 = vpop.permute.xlu0 %1141
        %1143 = vrot.lane.b32.xlu0 %v1105, 8
        %v1144 = vpop.permute.xlu0 %1143
        %1145 = vrot.lane.b32.xlu0 %v1108, 8
        %v1146 = vpop.permute.xlu0 %1145
        %1147 = vrot.lane.b32.xlu0 %v1110, 8
        %v1148 = vpop.permute.xlu0 %1147
        %1149 = vrot.lane.b32.xlu0 %v1113, 8
        %v1150 = vpop.permute.xlu0 %1149
        %1151 = vrot.lane.b32.xlu0 %v1115, 8
        %v1152 = vpop.permute.xlu0 %1151
        %1153 = vrot.lane.b32.xlu0 %v1118, 8
        %v1154 = vpop.permute.xlu0 %1153
        %1155 = vrot.lane.b32.xlu0 %v1120, 8
        %v1156 = vpop.permute.xlu0 %1155
        %1157 = vrot.lane.b32.xlu0 %v1123, 8
        %v1158 = vpop.permute.xlu0 %1157
        %1159 = vrot.lane.b32.xlu0 %v1125, 8
        %v1160 = vpop.permute.xlu0 %1159
        %1161 = vrot.lane.b32.xlu0 %v1128, 8
        %v1162 = vpop.permute.xlu0 %1161
        %1163 = vrot.lane.b32.xlu0 %v1130, 8
        %v1164 = vpop.permute.xlu0 %1163
        %1165 = vrot.lane.b32.xlu0 %v1133, 8
        %v1166 = vpop.permute.xlu0 %1165
        %1167 = vrot.lane.b32.xlu0 %v1135, 8
        %v1168 = vpop.permute.xlu0 %1167
        %1169 = vrot.lane.b32.xlu0 %v1138, 8
        %v1170 = vpop.permute.xlu0 %1169
        %1171 = vrot.lane.b32.xlu0 %v1140, 8
        %v1172 = vpop.permute.xlu0 %1171
        %1191 = vrot.lane.b32.xlu0 %v960, 12
        %v1192 = vpop.permute.xlu0 %1191
        %1193 = vrot.lane.b32.xlu0 %v961, 12
        %v1194 = vpop.permute.xlu0 %1193
        %1195 = vrot.lane.b32.xlu0 %v963, 12
        %v1196 = vpop.permute.xlu0 %1195
        %1197 = vrot.lane.b32.xlu0 %v964, 12
        %v1198 = vpop.permute.xlu0 %1197
        %1199 = vrot.lane.b32.xlu0 %v966, 12
        %v1200 = vpop.permute.xlu0 %1199
        %1201 = vrot.lane.b32.xlu0 %v967, 12
        %v1202 = vpop.permute.xlu0 %1201
        %1203 = vrot.lane.b32.xlu0 %v969, 12
        %v1204 = vpop.permute.xlu0 %1203
        %1205 = vrot.lane.b32.xlu0 %v970, 12
        %v1206 = vpop.permute.xlu0 %1205
        %1207 = vrot.lane.b32.xlu0 %v972, 12
        %v1208 = vpop.permute.xlu0 %1207
        %1209 = vrot.lane.b32.xlu0 %v973, 12
        %v1210 = vpop.permute.xlu0 %1209
        %1211 = vrot.lane.b32.xlu0 %v975, 12
        %v1212 = vpop.permute.xlu0 %1211
        %1213 = vrot.lane.b32.xlu0 %v976, 12
        %v1214 = vpop.permute.xlu0 %1213
        %1215 = vrot.lane.b32.xlu0 %v978, 12
        %v1216 = vpop.permute.xlu0 %1215
        %1217 = vrot.lane.b32.xlu0 %v979, 12
        %v1218 = vpop.permute.xlu0 %1217
        %1219 = vrot.lane.b32.xlu0 %v981, 12
        %v1220 = vpop.permute.xlu0 %1219
        %1221 = vrot.lane.b32.xlu0 %v982, 12
        %v1222 = vpop.permute.xlu0 %1221
        %v1240 = vrot.slane %v981, 1
        %v1241 = vrot.slane %v982, 1
        %v1242 = vsel %vm1011, %v1240, %v1241
        %v1243 = vrot.slane %v983, 1
        %v1244 = vsel %vm1011, %v1241, %v1243
        %1245 = vrot.lane.b32.xlu0 %v1019, 16
        %v1246 = vpop.permute.xlu0 %1245
        %1247 = vrot.lane.b32.xlu0 %v1021, 16
        %v1248 = vpop.permute.xlu0 %1247
        %1249 = vrot.lane.b32.xlu0 %v1024, 16
        %v1250 = vpop.permute.xlu0 %1249
        %1251 = vrot.lane.b32.xlu0 %v1026, 16
        %v1252 = vpop.permute.xlu0 %1251
        %1253 = vrot.lane.b32.xlu0 %v1029, 16
        %v1254 = vpop.permute.xlu0 %1253
        %1255 = vrot.lane.b32.xlu0 %v1031, 16
        %v1256 = vpop.permute.xlu0 %1255
        %1257 = vrot.lane.b32.xlu0 %v1034, 16
        %v1258 = vpop.permute.xlu0 %1257
        %1259 = vrot.lane.b32.xlu0 %v1036, 16
        %v1260 = vpop.permute.xlu0 %1259
        %1261 = vrot.lane.b32.xlu0 %v1039, 16
        %v1262 = vpop.permute.xlu0 %1261
        %1263 = vrot.lane.b32.xlu0 %v1041, 16
        %v1264 = vpop.permute.xlu0 %1263
        %1265 = vrot.lane.b32.xlu0 %v1044, 16
        %v1266 = vpop.permute.xlu0 %1265
        %1267 = vrot.lane.b32.xlu0 %v1046, 16
        %v1268 = vpop.permute.xlu0 %1267
        %1269 = vrot.lane.b32.xlu0 %v1049, 16
        %v1270 = vpop.permute.xlu0 %1269
        %1271 = vrot.lane.b32.xlu0 %v1051, 16
        %v1272 = vpop.permute.xlu0 %1271
        %1273 = vrot.lane.b32.xlu0 %v1242, 16
        %v1274 = vpop.permute.xlu0 %1273
        %1275 = vrot.lane.b32.xlu0 %v1244, 16
        %v1276 = vpop.permute.xlu0 %1275
        %v1293 = vrot.slane %v981, 2
        %v1294 = vrot.slane %v982, 2
        %v1295 = vsel %vm1100, %v1293, %v1294
        %v1296 = vrot.slane %v983, 2
        %v1297 = vsel %vm1100, %v1294, %v1296
        %1298 = vrot.lane.b32.xlu0 %v1108, 20
        %v1299 = vpop.permute.xlu0 %1298
        %1300 = vrot.lane.b32.xlu0 %v1110, 20
        %v1301 = vpop.permute.xlu0 %1300
        %1302 = vrot.lane.b32.xlu0 %v1113, 20
        %v1303 = vpop.permute.xlu0 %1302
        %1304 = vrot.lane.b32.xlu0 %v1115, 20
        %v1305 = vpop.permute.xlu0 %1304
        %1306 = vrot.lane.b32.xlu0 %v1118, 20
        %v1307 = vpop.permute.xlu0 %1306
        %1308 = vrot.lane.b32.xlu0 %v1120, 20
        %v1309 = vpop.permute.xlu0 %1308
        %1310 = vrot.lane.b32.xlu0 %v1123, 20
        %v1311 = vpop.permute.xlu0 %1310
        %1312 = vrot.lane.b32.xlu0 %v1125, 20
        %v1313 = vpop.permute.xlu0 %1312
        %1314 = vrot.lane.b32.xlu0 %v1128, 20
        %v1315 = vpop.permute.xlu0 %1314
        %1316 = vrot.lane.b32.xlu0 %v1130, 20
        %v1317 = vpop.permute.xlu0 %1316
        %1318 = vrot.lane.b32.xlu0 %v1133, 20
        %v1319 = vpop.permute.xlu0 %1318
        %1320 = vrot.lane.b32.xlu0 %v1135, 20
        %v1321 = vpop.permute.xlu0 %1320
        %1322 = vrot.lane.b32.xlu0 %v1138, 20
        %v1323 = vpop.permute.xlu0 %1322
        %1324 = vrot.lane.b32.xlu0 %v1140, 20
        %v1325 = vpop.permute.xlu0 %1324
        %1326 = vrot.lane.b32.xlu0 %v1295, 20
        %v1327 = vpop.permute.xlu0 %1326
        %1328 = vrot.lane.b32.xlu0 %v1297, 20
        %v1329 = vpop.permute.xlu0 %1328
        %1348 = vrot.lane.b32.xlu0 %v963, 24
        %v1349 = vpop.permute.xlu0 %1348
        %1350 = vrot.lane.b32.xlu0 %v964, 24
        %v1351 = vpop.permute.xlu0 %1350
        %1352 = vrot.lane.b32.xlu0 %v966, 24
        %v1353 = vpop.permute.xlu0 %1352
        %1354 = vrot.lane.b32.xlu0 %v967, 24
        %v1355 = vpop.permute.xlu0 %1354
        %1356 = vrot.lane.b32.xlu0 %v969, 24
        %v1357 = vpop.permute.xlu0 %1356
        %1358 = vrot.lane.b32.xlu0 %v970, 24
        %v1359 = vpop.permute.xlu0 %1358
        %1360 = vrot.lane.b32.xlu0 %v972, 24
        %v1361 = vpop.permute.xlu0 %1360
        %1362 = vrot.lane.b32.xlu0 %v973, 24
        %v1363 = vpop.permute.xlu0 %1362
        %1364 = vrot.lane.b32.xlu0 %v975, 24
        %v1365 = vpop.permute.xlu0 %1364
        %1366 = vrot.lane.b32.xlu0 %v976, 24
        %v1367 = vpop.permute.xlu0 %1366
        %1368 = vrot.lane.b32.xlu0 %v978, 24
        %v1369 = vpop.permute.xlu0 %1368
        %1370 = vrot.lane.b32.xlu0 %v979, 24
        %v1371 = vpop.permute.xlu0 %1370
        %1372 = vrot.lane.b32.xlu0 %v981, 24
        %v1373 = vpop.permute.xlu0 %1372
        %1374 = vrot.lane.b32.xlu0 %v982, 24
        %v1375 = vpop.permute.xlu0 %1374
        %1376 = vrot.lane.b32.xlu0 %v984, 24
        %v1377 = vpop.permute.xlu0 %1376
        %1378 = vrot.lane.b32.xlu0 %v985, 24
        %v1379 = vpop.permute.xlu0 %1378
        %v1397 = vrot.slane %v984, 1
        %v1398 = vrot.slane %v985, 1
        %v1399 = vsel %vm1011, %v1397, %v1398
        %v1400 = vrot.slane %v986, 1
        %v1401 = vsel %vm1011, %v1398, %v1400
        %1402 = vrot.lane.b32.xlu0 %v1024, 28
        %v1403 = vpop.permute.xlu0 %1402
        %1404 = vrot.lane.b32.xlu0 %v1026, 28
        %v1405 = vpop.permute.xlu0 %1404
        %1406 = vrot.lane.b32.xlu0 %v1029, 28
        %v1407 = vpop.permute.xlu0 %1406
        %1408 = vrot.lane.b32.xlu0 %v1031, 28
        %v1409 = vpop.permute.xlu0 %1408
        %1410 = vrot.lane.b32.xlu0 %v1034, 28
        %v1411 = vpop.permute.xlu0 %1410
        %1412 = vrot.lane.b32.xlu0 %v1036, 28
        %v1413 = vpop.permute.xlu0 %1412
        %1414 = vrot.lane.b32.xlu0 %v1039, 28
        %v1415 = vpop.permute.xlu0 %1414
        %1416 = vrot.lane.b32.xlu0 %v1041, 28
        %v1417 = vpop.permute.xlu0 %1416
        %1418 = vrot.lane.b32.xlu0 %v1044, 28
        %v1419 = vpop.permute.xlu0 %1418
        %1420 = vrot.lane.b32.xlu0 %v1046, 28
        %v1421 = vpop.permute.xlu0 %1420
        %1422 = vrot.lane.b32.xlu0 %v1049, 28
        %v1423 = vpop.permute.xlu0 %1422
        %1424 = vrot.lane.b32.xlu0 %v1051, 28
        %v1425 = vpop.permute.xlu0 %1424
        %1426 = vrot.lane.b32.xlu0 %v1242, 28
        %v1427 = vpop.permute.xlu0 %1426
        %1428 = vrot.lane.b32.xlu0 %v1244, 28
        %v1429 = vpop.permute.xlu0 %1428
        %1430 = vrot.lane.b32.xlu0 %v1399, 28
        %v1431 = vpop.permute.xlu0 %1430
        %1432 = vrot.lane.b32.xlu0 %v1401, 28
        %v1433 = vpop.permute.xlu0 %1432
        %v1450 = vrot.slane %v984, 2
        %v1451 = vrot.slane %v985, 2
        %v1452 = vsel %vm1100, %v1450, %v1451
        %v1453 = vrot.slane %v986, 2
        %v1454 = vsel %vm1100, %v1451, %v1453
        %1455 = vrot.lane.b32.xlu0 %v1113, 32
        %v1456 = vpop.permute.xlu0 %1455
        %1457 = vrot.lane.b32.xlu0 %v1115, 32
        %v1458 = vpop.permute.xlu0 %1457
        %1459 = vrot.lane.b32.xlu0 %v1118, 32
        %v1460 = vpop.permute.xlu0 %1459
        %1461 = vrot.lane.b32.xlu0 %v1120, 32
        %v1462 = vpop.permute.xlu0 %1461
        %1463 = vrot.lane.b32.xlu0 %v1123, 32
        %v1464 = vpop.permute.xlu0 %1463
        %1465 = vrot.lane.b32.xlu0 %v1125, 32
        %v1466 = vpop.permute.xlu0 %1465
        %1467 = vrot.lane.b32.xlu0 %v1128, 32
        %v1468 = vpop.permute.xlu0 %1467
        %1469 = vrot.lane.b32.xlu0 %v1130, 32
        %v1470 = vpop.permute.xlu0 %1469
        %1471 = vrot.lane.b32.xlu0 %v1133, 32
        %v1472 = vpop.permute.xlu0 %1471
        %1473 = vrot.lane.b32.xlu0 %v1135, 32
        %v1474 = vpop.permute.xlu0 %1473
        %1475 = vrot.lane.b32.xlu0 %v1138, 32
        %v1476 = vpop.permute.xlu0 %1475
        %1477 = vrot.lane.b32.xlu0 %v1140, 32
        %v1478 = vpop.permute.xlu0 %1477
        %1479 = vrot.lane.b32.xlu0 %v1295, 32
        %v1480 = vpop.permute.xlu0 %1479
        %1481 = vrot.lane.b32.xlu0 %v1297, 32
        %v1482 = vpop.permute.xlu0 %1481
        %1483 = vrot.lane.b32.xlu0 %v1452, 32
        %v1484 = vpop.permute.xlu0 %1483
        %1485 = vrot.lane.b32.xlu0 %v1454, 32
        %v1486 = vpop.permute.xlu0 %1485
        %vm1503 = vcmask 31744
        %v1504 = vsel %vm1503, %v957, %v1053
        %v1505 = vsel %vm1503, %v958, %v1055
        %v1506 = vsel %vm1503, %v960, %v1057
        %v1507 = vsel %vm1503, %v961, %v1059
        %v1508 = vsel %vm1503, %v963, %v1061
        %v1509 = vsel %vm1503, %v964, %v1063
        %v1510 = vsel %vm1503, %v966, %v1065
        %v1511 = vsel %vm1503, %v967, %v1067
        %v1512 = vsel %vm1503, %v969, %v1069
        %v1513 = vsel %vm1503, %v970, %v1071
        %v1514 = vsel %vm1503, %v972, %v1073
        %v1515 = vsel %vm1503, %v973, %v1075
        %v1516 = vsel %vm1503, %v975, %v1077
        %v1517 = vsel %vm1503, %v976, %v1079
        %v1518 = vsel %vm1503, %v978, %v1081
        %v1519 = vsel %vm1503, %v979, %v1083
        %vm1520 = vcmask 64512
        %v1521 = vsel %vm1520, %v1504, %v1142
        %v1522 = vsel %vm1520, %v1505, %v1144
        %v1523 = vsel %vm1520, %v1506, %v1146
        %v1524 = vsel %vm1520, %v1507, %v1148
        %v1525 = vsel %vm1520, %v1508, %v1150
        %v1526 = vsel %vm1520, %v1509, %v1152
        %v1527 = vsel %vm1520, %v1510, %v1154
        %v1528 = vsel %vm1520, %v1511, %v1156
        %v1529 = vsel %vm1520, %v1512, %v1158
        %v1530 = vsel %vm1520, %v1513, %v1160
        %v1531 = vsel %vm1520, %v1514, %v1162
        %v1532 = vsel %vm1520, %v1515, %v1164
        %v1533 = vsel %vm1520, %v1516, %v1166
        %v1534 = vsel %vm1520, %v1517, %v1168
        %v1535 = vsel %vm1520, %v1518, %v1170
        %v1536 = vsel %vm1520, %v1519, %v1172
        %vm1537 = vcmask 97280
        %v1538 = vsel %vm1537, %v1521, %v1192
        %v1539 = vsel %vm1537, %v1522, %v1194
        %v1540 = vsel %vm1537, %v1523, %v1196
        %v1541 = vsel %vm1537, %v1524, %v1198
        %v1542 = vsel %vm1537, %v1525, %v1200
        %v1543 = vsel %vm1537, %v1526, %v1202
        %v1544 = vsel %vm1537, %v1527, %v1204
        %v1545 = vsel %vm1537, %v1528, %v1206
        %v1546 = vsel %vm1537, %v1529, %v1208
        %v1547 = vsel %vm1537, %v1530, %v1210
        %v1548 = vsel %vm1537, %v1531, %v1212
        %v1549 = vsel %vm1537, %v1532, %v1214
        %v1550 = vsel %vm1537, %v1533, %v1216
        %v1551 = vsel %vm1537, %v1534, %v1218
        %v1552 = vsel %vm1537, %v1535, %v1220
        %v1553 = vsel %vm1537, %v1536, %v1222
        %v1554 = vsel %vm451, %v1538, %v1246
        %v1555 = vsel %vm451, %v1539, %v1248
        %v1556 = vsel %vm451, %v1540, %v1250
        %v1557 = vsel %vm451, %v1541, %v1252
        %v1558 = vsel %vm451, %v1542, %v1254
        %v1559 = vsel %vm451, %v1543, %v1256
        %v1560 = vsel %vm451, %v1544, %v1258
        %v1561 = vsel %vm451, %v1545, %v1260
        %v1562 = vsel %vm451, %v1546, %v1262
        %v1563 = vsel %vm451, %v1547, %v1264
        %v1564 = vsel %vm451, %v1548, %v1266
        %v1565 = vsel %vm451, %v1549, %v1268
        %v1566 = vsel %vm451, %v1550, %v1270
        %v1567 = vsel %vm451, %v1551, %v1272
        %v1568 = vsel %vm451, %v1552, %v1274
        %v1569 = vsel %vm451, %v1553, %v1276
        %vm1570 = vcmask 162816
        %v1571 = vsel %vm1570, %v1554, %v1299
        %v1572 = vsel %vm1570, %v1555, %v1301
        %v1573 = vsel %vm1570, %v1556, %v1303
        %v1574 = vsel %vm1570, %v1557, %v1305
        %v1575 = vsel %vm1570, %v1558, %v1307
        %v1576 = vsel %vm1570, %v1559, %v1309
        %v1577 = vsel %vm1570, %v1560, %v1311
        %v1578 = vsel %vm1570, %v1561, %v1313
        %v1579 = vsel %vm1570, %v1562, %v1315
        %v1580 = vsel %vm1570, %v1563, %v1317
        %v1581 = vsel %vm1570, %v1564, %v1319
        %v1582 = vsel %vm1570, %v1565, %v1321
        %v1583 = vsel %vm1570, %v1566, %v1323
        %v1584 = vsel %vm1570, %v1567, %v1325
        %v1585 = vsel %vm1570, %v1568, %v1327
        %v1586 = vsel %vm1570, %v1569, %v1329
        %vm1587 = vcmask 195584
        %v1588 = vsel %vm1587, %v1571, %v1349
        %v1589 = vsel %vm1587, %v1572, %v1351
        %v1590 = vsel %vm1587, %v1573, %v1353
        %v1591 = vsel %vm1587, %v1574, %v1355
        %v1592 = vsel %vm1587, %v1575, %v1357
        %v1593 = vsel %vm1587, %v1576, %v1359
        %v1594 = vsel %vm1587, %v1577, %v1361
        %v1595 = vsel %vm1587, %v1578, %v1363
        %v1596 = vsel %vm1587, %v1579, %v1365
        %v1597 = vsel %vm1587, %v1580, %v1367
        %v1598 = vsel %vm1587, %v1581, %v1369
        %v1599 = vsel %vm1587, %v1582, %v1371
        %v1600 = vsel %vm1587, %v1583, %v1373
        %v1601 = vsel %vm1587, %v1584, %v1375
        %v1602 = vsel %vm1587, %v1585, %v1377
        %v1603 = vsel %vm1587, %v1586, %v1379
        %vm1604 = vcmask 228352
        %v1605 = vsel %vm1604, %v1588, %v1403
        %v1606 = vsel %vm1604, %v1589, %v1405
        %v1607 = vsel %vm1604, %v1590, %v1407
        %v1608 = vsel %vm1604, %v1591, %v1409
        %v1609 = vsel %vm1604, %v1592, %v1411
        %v1610 = vsel %vm1604, %v1593, %v1413
        %v1611 = vsel %vm1604, %v1594, %v1415
        %v1612 = vsel %vm1604, %v1595, %v1417
        %v1613 = vsel %vm1604, %v1596, %v1419
        %v1614 = vsel %vm1604, %v1597, %v1421
        %v1615 = vsel %vm1604, %v1598, %v1423
        %v1616 = vsel %vm1604, %v1599, %v1425
        %v1617 = vsel %vm1604, %v1600, %v1427
        %v1618 = vsel %vm1604, %v1601, %v1429
        %v1619 = vsel %vm1604, %v1602, %v1431
        %v1620 = vsel %vm1604, %v1603, %v1433
        %vm1621 = vcmask 261120
        %v1622 = vsel %vm1621, %v1605, %v1456
        %v1623 = vsel %vm1621, %v1606, %v1458
        %v1624 = vsel %vm1621, %v1607, %v1460
        %v1625 = vsel %vm1621, %v1608, %v1462
        %v1626 = vsel %vm1621, %v1609, %v1464
        %v1627 = vsel %vm1621, %v1610, %v1466
        %v1628 = vsel %vm1621, %v1611, %v1468
        %v1629 = vsel %vm1621, %v1612, %v1470
        %v1630 = vsel %vm1621, %v1613, %v1472
        %v1631 = vsel %vm1621, %v1614, %v1474
        %v1632 = vsel %vm1621, %v1615, %v1476
        %v1633 = vsel %vm1621, %v1616, %v1478
        %v1634 = vsel %vm1621, %v1617, %v1480
        %v1635 = vsel %vm1621, %v1618, %v1482
        %v1636 = vsel %vm1621, %v1619, %v1484
        %v1637 = vsel %vm1621, %v1620, %v1486
        %v1638 = vld [vmem:[%s4] sm:$0xf]
        %v1639 = vld [vmem:[%s4 + $0x4] sm:$0xf]
        %v1640 = vld [vmem:[%s4 + $0x8] sm:$0xf]
        %v1641 = vld [vmem:[%s4 + $0xc] sm:$0xf]
        %v1642 = vld [vmem:[%s4 + $0x10] sm:$0x3]
        %v1643 = vunpack.c.l.bf16 %v1638
        %v1644 = vunpack.c.l.bf16 %v1639
        %v1645 = vunpack.c.l.bf16 %v1640
        %v1646 = vunpack.c.l.bf16 %v1641
        %v1647 = vunpack.c.l.bf16 %v1642
        %v1648 = vld [vmem:[%s5] sm:$0x1]
        %v1650 = vlaneseq
        %v1651 = vshrl.u32 %v1650, 7
        %v1652 = vsub.s32 0, %v1651
        %v1653 = vrot.slane %v1648, %v1652
        %vm1655 = vcmask 293888
        %v1657 = vsel %vm1655, %v1622, 0
        %v1660 = vsel %vm1655, %v1623, 0
        %v1663 = vsel %vm1655, %v1624, 0
        %v1666 = vsel %vm1655, %v1625, 0
        %v1669 = vsel %vm1655, %v1626, 0
        %v1672 = vsel %vm1655, %v1627, 0
        %v1675 = vsel %vm1655, %v1628, 0
        %v1678 = vsel %vm1655, %v1629, 0
        %v1681 = vsel %vm1655, %v1630, 0
        %v1684 = vsel %vm1655, %v1631, 0
        %v1687 = vsel %vm1655, %v1632, 0
        %v1690 = vsel %vm1655, %v1633, 0
        %v1693 = vsel %vm1655, %v1634, 0
        %v1696 = vsel %vm1655, %v1635, 0
        %v1699 = vsel %vm1655, %v1636, 0
        %v1702 = vsel %vm1655, %v1637, 0
        %vm1704 = vcmask 1043456
        %v1706 = vsel %vm1704, %v1647, 0
        %1708 = vmatprep.subr.mxu0 0.0
        %1709 = vmatpush1.msra.mxu0 %v1643
        %1710 = vmatprep.subr.mxu0 0.0
        %1711 = vmatpush1.msra.mxu0 %v1644
        %1712 = vmatprep.subr.mxu0 0.0
        %1713 = vmatpush1.msra.mxu0 %v1645
        %1714 = vmatprep.subr.mxu0 0.0
        %1715 = vmatpush1.msra.mxu0 %v1646
        %1716 = vmatprep.subr.mxu0 0.0
        %1717 = vmatpush1.msra.mxu0 %v1706
        %1718 = vmatprep.subr.mxu0 0.0
        %1719 = vmatpush1.msra.mxu0 0.0
        %1720 = vmatprep.subr.mxu0 0.0
        %1721 = vmatpush1.msra.mxu0 0.0
        %1722 = vmatprep.subr.mxu0 0.0
        %1723 = vmatpush1.msra.mxu0 0.0
        %1724 = vmatprep.subr.mxu0 0.0
        %1725 = vmatpush1.msra.mxu0 0.0
        %1726 = vmatprep.subr.mxu0 0.0
        %1727 = vmatpush1.msra.mxu0 0.0
        %1728 = vmatprep.subr.mxu0 0.0
        %1729 = vmatpush1.msra.mxu0 0.0
        %1730 = vmatprep.subr.mxu0 0.0
        %1731 = vmatpush1.msra.mxu0 0.0
        %1732 = vmatprep.subr.mxu0 0.0
        %1733 = vmatpush1.msra.mxu0 0.0
        %1734 = vmatprep.subr.mxu0 0.0
        %1735 = vmatpush1.msra.mxu0 0.0
        %1736 = vmatprep.subr.mxu0 0.0
        %1737 = vmatpush1.msra.mxu0 0.0
        %1738 = vmatprep.subr.mxu0 0.0
        %1739 = vmatpush1.msra.mxu0 0.0
        %1740 = vmatprep.subr.mxu0 0.0
        %1741 = vmatpush1.msra.mxu0 0.0
        %1742 = vmatprep.subr.mxu0 0.0
        %1743 = vmatpush1.msra.mxu0 0.0
        %1744 = vmatprep.subr.mxu0 0.0
        %1745 = vmatpush1.msra.mxu0 0.0
        %1746 = vmatprep.subr.mxu0 0.0
        %1747 = vmatpush1.msra.mxu0 0.0
        %1748 = vmatprep.subr.mxu0 0.0
        %1749 = vmatpush1.msra.mxu0 0.0
        %1750 = vmatprep.subr.mxu0 0.0
        %1751 = vmatpush1.msra.mxu0 0.0
        %1752 = vmatprep.subr.mxu0 0.0
        %1753 = vmatpush1.msra.mxu0 0.0
        %1754 = vmatprep.subr.mxu0 0.0
        %1755 = vmatpush1.msra.mxu0 0.0
        %1756 = vmatprep.subr.mxu0 0.0
        %1757 = vmatpush1.msra.mxu0 0.0
        %1758 = vmatprep.subr.mxu0 0.0
        %1759 = vmatpush1.msra.mxu0 0.0
        %1760 = vmatprep.subr.mxu0 0.0
        %1761 = vmatpush1.msra.mxu0 0.0
        %1762 = vmatprep.subr.mxu0 0.0
        %1763 = vmatpush1.msra.mxu0 0.0
        %1764 = vmatprep.subr.mxu0 0.0
        %1765 = vmatpush1.msra.mxu0 0.0
        %1766 = vmatprep.subr.mxu0 0.0
        %1767 = vmatpush1.msra.mxu0 0.0
        %1768 = vmatprep.subr.mxu0 0.0
        %1769 = vmatpush1.msra.mxu0 0.0
        %1770 = vmatprep.subr.mxu0 0.0
        %1771 = vmatpush1.msra.mxu0 0.0
        %1772 = vmatprep.mubr.f32.mxu0 0.0
        %1773 = vmatmul.mubr.f32.gmra.mrb[0].mxu0 %v1657
        %v1774 = vpop.f32.mrb[0].mxu0
        %v1775 = vadd.f32 %v1653, %v1774
        %v1776 = vpop.f32.mrb[0].mxu0
        %1777 = vmatprep.mubr.f32.mxu0 0.0
        %1778 = vmatmul.mubr.f32.gmra.mrb[0].mxu0 %v1660
        %v1779 = vpop.f32.mrb[0].mxu0
        %v1780 = vadd.f32 %v1653, %v1779
        %v1781 = vpop.f32.mrb[0].mxu0
        %1782 = vmatprep.mubr.f32.mxu0 0.0
        %1783 = vmatmul.mubr.f32.gmra.mrb[0].mxu0 %v1663
        %v1784 = vpop.f32.mrb[0].mxu0
        %v1785 = vadd.f32 %v1653, %v1784
        %v1786 = vpop.f32.mrb[0].mxu0
        %1787 = vmatprep.mubr.f32.mxu0 0.0
        %1788 = vmatmul.mubr.f32.gmra.mrb[0].mxu0 %v1666
        %v1789 = vpop.f32.mrb[0].mxu0
        %v1790 = vadd.f32 %v1653, %v1789
        %v1791 = vpop.f32.mrb[0].mxu0
        %1792 = vmatprep.mubr.f32.mxu0 0.0
        %1793 = vmatmul.mubr.f32.gmra.mrb[0].mxu0 %v1669
        %v1794 = vpop.f32.mrb[0].mxu0
        %v1795 = vadd.f32 %v1653, %v1794
        %v1796 = vpop.f32.mrb[0].mxu0
        %1797 = vmatprep.mubr.f32.mxu0 0.0
        %1798 = vmatmul.mubr.f32.gmra.mrb[0].mxu0 %v1672
        %v1799 = vpop.f32.mrb[0].mxu0
        %v1800 = vadd.f32 %v1653, %v1799
        %v1801 = vpop.f32.mrb[0].mxu0
        %1802 = vmatprep.mubr.f32.mxu0 0.0
        %1803 = vmatmul.mubr.f32.gmra.mrb[0].mxu0 %v1675
        %v1804 = vpop.f32.mrb[0].mxu0
        %v1805 = vadd.f32 %v1653, %v1804
        %v1806 = vpop.f32.mrb[0].mxu0
        %1807 = vmatprep.mubr.f32.mxu0 0.0
        %1808 = vmatmul.mubr.f32.gmra.mrb[0].mxu0 %v1678
        %v1809 = vpop.f32.mrb[0].mxu0
        %v1810 = vadd.f32 %v1653, %v1809
        %v1811 = vpop.f32.mrb[0].mxu0
        %1812 = vmatprep.mubr.f32.mxu0 0.0
        %1813 = vmatmul.mubr.f32.gmra.mrb[0].mxu0 %v1681
        %v1814 = vpop.f32.mrb[0].mxu0
        %v1815 = vadd.f32 %v1653, %v1814
        %v1816 = vpop.f32.mrb[0].mxu0
        %1817 = vmatprep.mubr.f32.mxu0 0.0
        %1818 = vmatmul.mubr.f32.gmra.mrb[0].mxu0 %v1684
        %v1819 = vpop.f32.mrb[0].mxu0
        %v1820 = vadd.f32 %v1653, %v1819
        %v1821 = vpop.f32.mrb[0].mxu0
        %1822 = vmatprep.mubr.f32.mxu0 0.0
        %1823 = vmatmul.mubr.f32.gmra.mrb[0].mxu0 %v1687
        %v1824 = vpop.f32.mrb[0].mxu0
        %v1825 = vadd.f32 %v1653, %v1824
        %v1826 = vpop.f32.mrb[0].mxu0
        %1827 = vmatprep.mubr.f32.mxu0 0.0
        %1828 = vmatmul.mubr.f32.gmra.mrb[0].mxu0 %v1690
        %v1829 = vpop.f32.mrb[0].mxu0
        %v1830 = vadd.f32 %v1653, %v1829
        %v1831 = vpop.f32.mrb[0].mxu0
        %1832 = vmatprep.mubr.f32.mxu0 0.0
        %1833 = vmatmul.mubr.f32.gmra.mrb[0].mxu0 %v1693
        %v1834 = vpop.f32.mrb[0].mxu0
        %v1835 = vadd.f32 %v1653, %v1834
        %v1836 = vpop.f32.mrb[0].mxu0
        %1837 = vmatprep.mubr.f32.mxu0 0.0
        %1838 = vmatmul.mubr.f32.gmra.mrb[0].mxu0 %v1696
        %v1839 = vpop.f32.mrb[0].mxu0
        %v1840 = vadd.f32 %v1653, %v1839
        %v1841 = vpop.f32.mrb[0].mxu0
        %1842 = vmatprep.mubr.f32.mxu0 0.0
        %1843 = vmatmul.mubr.f32.gmra.mrb[0].mxu0 %v1699
        %v1844 = vpop.f32.mrb[0].mxu0
        %v1845 = vadd.f32 %v1653, %v1844
        %v1846 = vpop.f32.mrb[0].mxu0
        %1847 = vmatprep.mubr.f32.mxu0 0.0
        %1848 = vmatmul.mubr.f32.gmra.mrb[0].mxu0 %v1702
        %v1849 = vpop.f32.mrb[0].mxu0
        %v1850 = vadd.f32 %v1653, %v1849
        %v1851 = vpop.f32.mrb[0].mxu0
        %1852 = vdwg.mxu0
        %v1853 = vmax.f32 %v1775, 0.0
        %v1854 = vmax.f32 %v1780, 0.0
        %v1855 = vmax.f32 %v1785, 0.0
        %v1856 = vmax.f32 %v1790, 0.0
        %v1857 = vmax.f32 %v1795, 0.0
        %v1858 = vmax.f32 %v1800, 0.0
        %v1859 = vmax.f32 %v1805, 0.0
        %v1860 = vmax.f32 %v1810, 0.0
        %v1861 = vmax.f32 %v1815, 0.0
        %v1862 = vmax.f32 %v1820, 0.0
        %v1863 = vmax.f32 %v1825, 0.0
        %v1864 = vmax.f32 %v1830, 0.0
        %v1865 = vmax.f32 %v1835, 0.0
        %v1866 = vmax.f32 %v1840, 0.0
        %v1867 = vmax.f32 %v1845, 0.0
        %v1868 = vmax.f32 %v1850, 0.0
        %v1869 = vld [vmem:[%s6] sm:$0xf]
        %v1870 = vld [vmem:[%s6 + $0x4] sm:$0xf]
        %v1871 = vunpack.c.l.bf16 %v1869
        %v1872 = vunpack.c.l.bf16 %v1870
        %v1873 = vld [vmem:[%s7] sm:$0xff]
        %v1874 = vld [vmem:[%s7 + $0x8] sm:$0xff]
        %1876 = vset.pattern.permute.xlu0 0
        %1877 = vperm.xlu0 %1876, %v1873
        %v1878 = vpop.permute.xlu0 %1877
        %1881 = vset.pattern.permute.xlu0 0
        %1882 = vperm.xlu0 %1881, %v1874
        %v1883 = vpop.permute.xlu0 %1882
        %v1886 = vsel %vm1503, %v1871, 0
        %v1889 = vsel %vm1503, %v1872, 0
        %v1892 = vsel %vm1503, %v1853, 0
        %v1895 = vsel %vm1503, %v1854, 0
        %v1898 = vsel %vm1503, %v1855, 0
        %v1901 = vsel %vm1503, %v1856, 0
        %v1904 = vsel %vm1503, %v1857, 0
        %v1907 = vsel %vm1503, %v1858, 0
        %v1910 = vsel %vm1503, %v1859, 0
        %v1913 = vsel %vm1503, %v1860, 0
        %v1916 = vsel %vm1503, %v1861, 0
        %v1919 = vsel %vm1503, %v1862, 0
        %v1922 = vsel %vm1503, %v1863, 0
        %v1925 = vsel %vm1503, %v1864, 0
        %v1928 = vsel %vm1503, %v1865, 0
        %v1931 = vsel %vm1503, %v1866, 0
        %v1934 = vsel %vm1503, %v1867, 0
        %v1937 = vsel %vm1503, %v1868, 0
        %1939 = vmatprep.subr.mxu0 0.0
        %1940 = vmatpush1.xpose.msra.mxu0 %v1892
        %1941 = vmatprep.subr.mxu0 0.0
        %1942 = vmatpush1.xpose.msra.mxu0 %v1895
        %1943 = vmatprep.subr.mxu0 0.0
        %1944 = vmatpush1.xpose.msra.mxu0 %v1898
        %1945 = vmatprep.subr.mxu0 0.0
        %1946 = vmatpush1.xpose.msra.mxu0 %v1901
        %1947 = vmatprep.subr.mxu0 0.0
        %1948 = vmatpush1.xpose.msra.mxu0 %v1904
        %1949 = vmatprep.subr.mxu0 0.0
        %1950 = vmatpush1.xpose.msra.mxu0 %v1907
        %1951 = vmatprep.subr.mxu0 0.0
        %1952 = vmatpush1.xpose.msra.mxu0 %v1910
        %1953 = vmatprep.subr.mxu0 0.0
        %1954 = vmatpush1.xpose.msra.mxu0 %v1913
        %1955 = vmatprep.subr.mxu0 0.0
        %1956 = vmatpush1.xpose.msra.mxu0 %v1916
        %1957 = vmatprep.subr.mxu0 0.0
        %1958 = vmatpush1.xpose.msra.mxu0 %v1919
        %1959 = vmatprep.subr.mxu0 0.0
        %1960 = vmatpush1.xpose.msra.mxu0 %v1922
        %1961 = vmatprep.subr.mxu0 0.0
        %1962 = vmatpush1.xpose.msra.mxu0 %v1925
        %1963 = vmatprep.subr.mxu0 0.0
        %1964 = vmatpush1.xpose.msra.mxu0 %v1928
        %1965 = vmatprep.subr.mxu0 0.0
        %1966 = vmatpush1.xpose.msra.mxu0 %v1931
        %1967 = vmatprep.subr.mxu0 0.0
        %1968 = vmatpush1.xpose.msra.mxu0 %v1934
        %1969 = vmatprep.subr.mxu0 0.0
        %1970 = vmatpush1.xpose.msra.mxu0 %v1937
        %1971 = vmatprep.subr.mxu0 0.0
        %1972 = vmatpush1.xpose.msra.mxu0 0.0
        %1973 = vmatprep.subr.mxu0 0.0
        %1974 = vmatpush1.xpose.msra.mxu0 0.0
        %1975 = vmatprep.subr.mxu0 0.0
        %1976 = vmatpush1.xpose.msra.mxu0 0.0
        %1977 = vmatprep.subr.mxu0 0.0
        %1978 = vmatpush1.xpose.msra.mxu0 0.0
        %1979 = vmatprep.subr.mxu0 0.0
        %1980 = vmatpush1.xpose.msra.mxu0 0.0
        %1981 = vmatprep.subr.mxu0 0.0
        %1982 = vmatpush1.xpose.msra.mxu0 0.0
        %1983 = vmatprep.subr.mxu0 0.0
        %1984 = vmatpush1.xpose.msra.mxu0 0.0
        %1985 = vmatprep.subr.mxu0 0.0
        %1986 = vmatpush1.xpose.msra.mxu0 0.0
        %1987 = vmatprep.subr.mxu0 0.0
        %1988 = vmatpush1.xpose.msra.mxu0 0.0
        %1989 = vmatprep.subr.mxu0 0.0
        %1990 = vmatpush1.xpose.msra.mxu0 0.0
        %1991 = vmatprep.subr.mxu0 0.0
        %1992 = vmatpush1.xpose.msra.mxu0 0.0
        %1993 = vmatprep.subr.mxu0 0.0
        %1994 = vmatpush1.xpose.msra.mxu0 0.0
        %1995 = vmatprep.subr.mxu0 0.0
        %1996 = vmatpush1.xpose.msra.mxu0 0.0
        %1997 = vmatprep.subr.mxu0 0.0
        %1998 = vmatpush1.xpose.msra.mxu0 0.0
        %1999 = vmatprep.subr.mxu0 0.0
        %2000 = vmatpush1.xpose.msra.mxu0 0.0
        %2001 = vmatprep.subr.mxu0 0.0
        %2002 = vmatpush1.xpose.msra.mxu0 0.0
        %2003 = vmatprep.mubr.f32.mxu0 0.0
        %2004 = vmatmul.mubr.f32.gmra.mrb[0].mxu0 %v1886
        %v2005 = vpop.f32.mrb[0].mxu0
        %v2006 = vadd.f32 %v1878, %v2005
        %v2007 = vpop.f32.mrb[0].mxu0
        %2008 = vmatprep.mubr.f32.mxu0 0.0
        %2009 = vmatmul.mubr.f32.gmra.mrb[0].mxu0 %v1889
        %v2010 = vpop.f32.mrb[0].mxu0
        %v2011 = vadd.f32 %v1883, %v2010
        %v2012 = vpop.f32.mrb[0].mxu0
        %2013 = vdwg.mxu0
        %v2014 = vld [vmem:[%s336] sm:$0xff]
        %v2015 = vld [vmem:[%s336 + $0x8] sm:$0xff]
        %v2016 = vadd.f32 %v2006, %v2014
        %v2017 = vadd.f32 %v2011, %v2015
        %v2018 = vmax.f32 %v2016, 0.0
        %v2019 = vmax.f32 %v2017, 0.0
        %2020 = vst [vmem:[%s370] sm:$0xff] %v2018
        %2021 = vst [vmem:[%s370 + $0x8] sm:$0xff] %v2019
        %s2022 = sand.u32 %s221, 1
        %s2023 = sand.u32 %s221, 1
        %s2024 = smul.addr %s2023, 16
        %s2025 = scalar_lea.vmem [#allocation3], %s2024
        // Predicated region
        $region91: #{res_block_forward.1} parent=85 // pred_check
          %p2026 = pneg %p231
        $region92: #{res_block_forward.1} parent=85 // pred_check_branch
          %2028 = sbr.rel (%p2026) target = $region94
        $region93: #{res_block_forward.1} parent=85 // pred_region
          %s2029 = smul.addr %s23, 4
          %s2030 = sadd.s32 %s24, %s2029
          %s2031 = smul.addr %s2030, 8
          %s2032 = scalar_lea.vmem %s8, %s2031
          // Predicated region
          $region95: #{res_block_forward.1} parent=93 // pred_check
            _
          $region96: #{res_block_forward.1} parent=93 // pred_check_branch
            %2034 = sbr.rel (0) target = $region98
          $region97: #{res_block_forward.1} parent=93 // pred_region
            // Predicated region
            $region99: #{res_block_forward.1} parent=97 // pred_check
              _
            $region100: #{res_block_forward.1} parent=97 // pred_check_branch
              %2036 = sbr.rel (0) target = $region102
            $region101: #{res_block_forward.1} parent=97 // pred_region
              // Predicated region
              $region114: #{res_block_forward.1} parent=101 // pred_check
                _
              $region115: #{res_block_forward.1} parent=101 // pred_check_branch
                %2053 = sbr.rel (0) target = $region117
              $region116: #{res_block_forward.1} parent=101 // pred_region
                loop: start=0, step=1, limit=1
                $region118: #{res_block_forward.1} parent=116 // loop_pre_header
                  _
                $region119: #{res_block_forward.1} parent=116 // loop_header
                  %s2055 = sphi 0, %s2059
                  %p2056 = scmp.ge.s32.totalorder %s2055, 1
                  %s2060 = sphi %s2025, %s2025
                  %s2061 = sphi %s2032, %s2032
                $region120: #{res_block_forward.1} parent=116 // loop_header_branch
                  %2058 = sbr.rel (%p2056) target = $region124
                $region121: #{res_block_forward.1} parent=116 // loop_body
                  %v2062 = vld [vmem:[%s2060] sm:$0xff]
                  %2063 = vst [vmem:[%s2061] sm:$0xff] %v2062
                  %v2064 = vld [vmem:[%s2060 + $0x8] sm:$0xff]
                  %2065 = vst [vmem:[%s2061 + $0x10] sm:$0xff] %v2064
                $region122: #{res_block_forward.1} parent=116 // loop_footer
                  %s2059 = sadd.s32 1, %s2055
                $region123: #{res_block_forward.1} parent=116 // loop_footer_branch
                  %2054 = sbr.rel target = $region119
                $region124: #{res_block_forward.1} parent=116 // loop_exit
                  _
              $region117: #{res_block_forward.1} parent=101 // pred_fallthru
                _
              // Predicated region
              $region125: #{res_block_forward.1} parent=101 // pred_check
                _
              $region126: #{res_block_forward.1} parent=101 // pred_check_branch
                %2067 = sbr.rel target = $region128
              $region127: #{res_block_forward.1} parent=101 // pred_region
                _
              $region128: #{res_block_forward.1} parent=101 // pred_fallthru
                _
            $region102: #{res_block_forward.1} parent=97 // pred_fallthru
              _
            // Predicated region
            $region103: #{res_block_forward.1} parent=97 // pred_check
              _
            $region104: #{res_block_forward.1} parent=97 // pred_check_branch
              %2038 = sbr.rel target = $region106
            $region105: #{res_block_forward.1} parent=97 // pred_region
              loop: start=0, step=1, limit=1
              $region107: #{res_block_forward.1} parent=105 // loop_pre_header
                _
              $region108: #{res_block_forward.1} parent=105 // loop_header
                %s2041 = sphi 0, %s2045
                %p2042 = scmp.ge.s32.totalorder %s2041, 1
                %s2046 = sphi %s2025, %s2025
                %s2047 = sphi %s2032, %s2032
              $region109: #{res_block_forward.1} parent=105 // loop_header_branch
                %2044 = sbr.rel (%p2042) target = $region113
              $region110: #{res_block_forward.1} parent=105 // loop_body
                %v2048 = vld [vmem:[%s2046] sm:$0xff]
                %2049 = vst [vmem:[%s2047] sm:$0xff] %v2048
                %v2050 = vld [vmem:[%s2046 + $0x8] sm:$0xff]
                %2051 = vst [vmem:[%s2047 + $0x10] sm:$0xff] %v2050
              $region111: #{res_block_forward.1} parent=105 // loop_footer
                %s2045 = sadd.s32 1, %s2041
              $region112: #{res_block_forward.1} parent=105 // loop_footer_branch
                %2040 = sbr.rel target = $region108
              $region113: #{res_block_forward.1} parent=105 // loop_exit
                _
            $region106: #{res_block_forward.1} parent=97 // pred_fallthru
              _
          $region98: #{res_block_forward.1} parent=93 // pred_fallthru
            _
          %2068 = vnop
        $region94: #{res_block_forward.1} parent=85 // pred_fallthru
          _
      $region86: #{res_block_forward.1} parent=5 // pred_fallthru
        _
      %p2069 = scmp.le.s32.totalorder 2, %s14
      // Predicated region
      $region129: #{res_block_forward.1} parent=5 // pred_check
        %p2070 = pneg %p2069
      $region130: #{res_block_forward.1} parent=5 // pred_check_branch
        %2072 = sbr.rel (%p2070) target = $region132
      $region131: #{res_block_forward.1} parent=5 // pred_region
        %s2073 = ssub.s32 %s14, 2
        // Predicated region
        $region133: #{res_block_forward.1} parent=131 // pred_check
          %p2074 = pneg %p237
        $region134: #{res_block_forward.1} parent=131 // pred_check_branch
          %2076 = sbr.rel (%p2074) target = $region136
        $region135: #{res_block_forward.1} parent=131 // pred_region
          %s2077 = sand.u32 %s222, 1
          %s2078 = sand.u32 %s222, 1
          %s2079 = smul.addr %s2078, 16
          %s2080 = scalar_lea.vmem [#allocation3], %s2079
        $region136: #{res_block_forward.1} parent=131 // pred_fallthru
          _
      $region132: #{res_block_forward.1} parent=5 // pred_fallthru
        _
    $region6: #{res_block_forward.1} parent=1 // loop_footer
      %s18 = sadd.s32 1, %s14
    $region7: #{res_block_forward.1} parent=1 // loop_footer_branch
      %13 = sbr.rel target = $region3
    $region8: #{res_block_forward.1} parent=1 // loop_exit
      _

</llo_original>
